<compile_context>
chip_gen: v5e
topology: v5e:2x2
jax: 0.10.0
libtpu: 0.0.40
codegen_flags: <defaults>
</compile_context>

<pallas_src>
import jax
import jax.numpy as jnp
from jax.experimental import pallas as pl
from jax.experimental.pallas import tpu as pltpu

D_IN, H1, H2, H3, D_OUT = 1030, 512, 256, 64, 1
NEG_SLOPE = 0.01            # nn.LeakyReLU default negative_slope
TB_DEFAULT = 512            # batch tile upper bound (v6e/v7x sweet spot)


def _round_up(n, m):
    return ((n + m - 1) // m) * m


def _leaky_relu(x):
    return jnp.where(x > 0, x, NEG_SLOPE * x)


def mlp_kernel(x_ref,
               w1_ref, b1_ref,
               w2_ref, b2_ref,
               w3_ref, b3_ref,
               w4_ref, b4_ref,
               o_ref):
    """Fused 4-layer MLP for one (tb, 1030) batch tile.

    bf16 operands on the MXU with f32 accumulation; bias + LeakyReLU on the
    f32 accumulator; final 64->1 layer on the VPU (mul + lane reduction).
    """
    # Cast to bf16 in-kernel (input stays f32 in HBM -> single 4 B/elt read).
    x = x_ref[...].astype(jnp.bfloat16)                                # (tb, 1030)

    h = jnp.dot(x, w1_ref[...], preferred_element_type=jnp.float32)   # (tb, 512) f32
    h = _leaky_relu(h + b1_ref[...]).astype(jnp.bfloat16)

    h = jnp.dot(h, w2_ref[...], preferred_element_type=jnp.float32)   # (tb, 256) f32
    h = _leaky_relu(h + b2_ref[...]).astype(jnp.bfloat16)

    h = jnp.dot(h, w3_ref[...], preferred_element_type=jnp.float32)   # (tb, 64) f32
    h = _leaky_relu(h + b3_ref[...])                                   # stay f32

    # fc4: (tb, 64) * (1, 64) -> lane reduction -> (tb, 1).  Keeps the 1-wide
    # output off the MXU (an N=1 matmul would waste 255/256 output lanes).
    z = jnp.sum(h * w4_ref[...], axis=-1, keepdims=True) + b4_ref[...]
    sig = pl.reciprocal(1.0 + jnp.exp(-z), approx=True)                # EUP recip
    o_ref[...] = sig.astype(o_ref.dtype)


def prepare_params(params):
    """One-time conversion of f32 torch-layout params into kernel-ready form.

    Hoisted out of the forward path so the bf16 casts / reshapes are not
    re-executed (and re-materialized in HBM) on every call.
    """
    return dict(
        w1=params["w1"].astype(jnp.bfloat16),               # (1030, 512)
        w2=params["w2"].astype(jnp.bfloat16),               # (512, 256)
        w3=params["w3"].astype(jnp.bfloat16),               # (256, 64)
        w4=params["w4"].reshape(1, H3).astype(jnp.float32),  # (1, 64)  VPU path
        b1=params["b1"].reshape(1, H1).astype(jnp.float32),
        b2=params["b2"].reshape(1, H2).astype(jnp.float32),
        b3=params["b3"].reshape(1, H3).astype(jnp.float32),
        b4=params["b4"].reshape(1, 1).astype(jnp.float32),
    )


def _choose_tb(B, tb_max=TB_DEFAULT):
    """Batch-tile heuristic.

    - B <= 128: one full-batch tile (block == array dim, always legal; v5e's
      MXU is already filled at 128 rows).
    - Larger B: at least two tiles so v7x's two TensorCores both get work,
      capped at tb_max (512) which keeps per-step overhead small on v6e/v7x
      while staying far under the scoped-VMEM default.
    """
    if B <= 128:
        return B
    two_way = _round_up((B + 1) // 2, 128)
    return min(tb_max, two_way)


def mlp_forward(x, prep, *, tb=None):
    """x: (B, 1030) float32.  prep: dict from prepare_params()."""
    B = x.shape[0]
    if tb is None:
        tb = _choose_tb(B)
    n_tiles = pl.cdiv(B, tb)

    def full_block(arr):
        # Whole-array block, identical for every grid step (grid-invariant ->
        # Pallas fetches it once and keeps it resident).
        return pl.BlockSpec(arr.shape, lambda i: (0, 0))

    return pl.pallas_call(
        mlp_kernel,
        out_shape=jax.ShapeDtypeStruct((B, D_OUT), jnp.float32),
        grid_spec=pltpu.PrefetchScalarGridSpec(
            num_scalar_prefetch=0,
            grid=(n_tiles,),
            in_specs=[
                pl.BlockSpec((tb, D_IN), lambda i: (i, 0)),   # x tile (f32)
                full_block(prep["w1"]), full_block(prep["b1"]),
                full_block(prep["w2"]), full_block(prep["b2"]),
                full_block(prep["w3"]), full_block(prep["b3"]),
                full_block(prep["w4"]), full_block(prep["b4"]),
            ],
            out_specs=pl.BlockSpec((tb, D_OUT), lambda i: (i, 0)),
        ),
        compiler_params=pltpu.CompilerParams(
            dimension_semantics=("parallel",)),   # shards tiles across TCs on v7x
    )(x, prep["w1"], prep["b1"], prep["w2"], prep["b2"],
      prep["w3"], prep["b3"], prep["w4"], prep["b4"])


def init_params(key):
    """Deterministic init matching torch.nn.Linear default: U(-1/sqrt(fan_in), +).

    Weights stored as (in_features, out_features) = transpose of torch layout.
    """
    params = {}
    dims = [(D_IN, H1), (H1, H2), (H2, H3), (H3, D_OUT)]
    for idx, (fan_in, fan_out) in enumerate(dims, start=1):
        key, kw, kb = jax.random.split(key, 3)
        bound = 1.0 / (fan_in ** 0.5)
        params[f"w{idx}"] = jax.random.uniform(
            kw, (fan_in, fan_out), jnp.float32, minval=-bound, maxval=bound)
        params[f"b{idx}"] = jax.random.uniform(
            kb, (fan_out,), jnp.float32, minval=-bound, maxval=bound)
    return params


def reference_forward(x, params):
    """Pure-JAX f32 reference matching the torch forward."""
    h = x
    for i in range(1, 4):
        h = h @ params[f"w{i}"] + params[f"b{i}"]
        h = jnp.where(h > 0, h, NEG_SLOPE * h)
    z = h @ params["w4"] + params["b4"]
    return jax.nn.sigmoid(z)


if __name__ == "__main__":
    key = jax.random.PRNGKey(0)
    kp, kx = jax.random.split(key)
    params = init_params(kp)
    prep = prepare_params(params)          # one-time, outside the forward path

    B = 4  # small test batch -> single full-batch tile, no padding anywhere
    x = jax.random.normal(kx, (B, D_IN), jnp.float32)

    out = jax.block_until_ready(mlp_forward(x, prep))
    ref = reference_forward(x, params)

    assert out.shape == (B, D_OUT)
    # bf16 matmuls with f32 accumulation (+ approx reciprocal in the sigmoid)
    # vs. f32 reference -> loose tolerance
    assert jnp.allclose(out, ref, atol=2e-2, rtol=2e-2), (
        "max abs err = %g" % float(jnp.max(jnp.abs(out - ref))))

    print("KERNEL_OK")
</pallas_src>

<mosaic_0001>
module attributes {stable_mosaic.version = 11 : i64} {
  func.func @mlp_kernel(%arg0: i32, %arg1: memref<4x1030xf32, #tpu.memory_space<vmem>>, %arg2: memref<1030x512xbf16, #tpu.memory_space<vmem>>, %arg3: memref<1x512xf32, #tpu.memory_space<vmem>>, %arg4: memref<512x256xbf16, #tpu.memory_space<vmem>>, %arg5: memref<1x256xf32, #tpu.memory_space<vmem>>, %arg6: memref<256x64xbf16, #tpu.memory_space<vmem>>, %arg7: memref<1x64xf32, #tpu.memory_space<vmem>>, %arg8: memref<1x64xf32, #tpu.memory_space<vmem>>, %arg9: memref<1x1xf32, #tpu.memory_space<vmem>>, %arg10: memref<4x1xf32, #tpu.memory_space<vmem>>) attributes {dimension_semantics = [#tpu.dimension_semantics<parallel>], iteration_bounds = array<i64: 1>, scalar_prefetch = 0 : i64, scratch_operands = 0 : i64, tpu.core_type = #tpu.core_type<tc>, window_params = [{transform_indices = @transform_0, window_bounds = array<i64: 4, 1030>}, {pipeline_mode = #tpu.pipeline_mode<synchronous>, transform_indices = @transform_1, window_bounds = array<i64: 1030, 512>}, {pipeline_mode = #tpu.pipeline_mode<synchronous>, transform_indices = @transform_2, window_bounds = array<i64: 1, 512>}, {pipeline_mode = #tpu.pipeline_mode<synchronous>, transform_indices = @transform_3, window_bounds = array<i64: 512, 256>}, {pipeline_mode = #tpu.pipeline_mode<synchronous>, transform_indices = @transform_4, window_bounds = array<i64: 1, 256>}, {pipeline_mode = #tpu.pipeline_mode<synchronous>, transform_indices = @transform_5, window_bounds = array<i64: 256, 64>}, {pipeline_mode = #tpu.pipeline_mode<synchronous>, transform_indices = @transform_6, window_bounds = array<i64: 1, 64>}, {pipeline_mode = #tpu.pipeline_mode<synchronous>, transform_indices = @transform_7, window_bounds = array<i64: 1, 64>}, {pipeline_mode = #tpu.pipeline_mode<synchronous>, transform_indices = @transform_8, window_bounds = array<i64: 1, 1>}, {transform_indices = @transform_9, window_bounds = array<i64: 4, 1>}]} {
    %c0 = arith.constant 0 : index
    %c0_0 = arith.constant 0 : index
    %0 = vector.load %arg1[%c0, %c0_0] : memref<4x1030xf32, #tpu.memory_space<vmem>>, vector<4x1030xf32>
    %1 = arith.truncf %0 : vector<4x1030xf32> to vector<4x1030xbf16>
    %c0_1 = arith.constant 0 : index
    %c0_2 = arith.constant 0 : index
    %2 = vector.load %arg2[%c0_1, %c0_2] : memref<1030x512xbf16, #tpu.memory_space<vmem>>, vector<1030x512xbf16>
    %cst = arith.constant dense<0.000000e+00> : vector<4x512xf32>
    %3 = tpu.matmul %1, %2, %cst {dimension_numbers = #tpu.dot_dimension_numbers<[1], [0], [0], [1], [0, 0, 1, 1], [], []>} : vector<4x1030xbf16>, vector<1030x512xbf16>, vector<4x512xf32> -> vector<4x512xf32>
    %c0_3 = arith.constant 0 : index
    %c0_4 = arith.constant 0 : index
    %4 = vector.load %arg3[%c0_3, %c0_4] : memref<1x512xf32, #tpu.memory_space<vmem>>, vector<1x512xf32>
    %5 = vector.broadcast %4 : vector<1x512xf32> to vector<4x512xf32>
    %6 = arith.addf %3, %5 : vector<4x512xf32>
    %cst_5 = arith.constant 0.000000e+00 : f32
    %7 = vector.broadcast %cst_5 : f32 to vector<4x512xf32>
    %8 = arith.cmpf ogt, %6, %7 : vector<4x512xf32>
    %cst_6 = arith.constant 0.00999999977 : f32
    %9 = vector.broadcast %cst_6 : f32 to vector<4x512xf32>
    %10 = arith.mulf %9, %6 : vector<4x512xf32>
    %11 = arith.select %8, %6, %10 : vector<4x512xi1>, vector<4x512xf32>
    %12 = arith.truncf %11 : vector<4x512xf32> to vector<4x512xbf16>
    %c0_7 = arith.constant 0 : index
    %c0_8 = arith.constant 0 : index
    %13 = vector.load %arg4[%c0_7, %c0_8] : memref<512x256xbf16, #tpu.memory_space<vmem>>, vector<512x256xbf16>
    %cst_9 = arith.constant dense<0.000000e+00> : vector<4x256xf32>
    %14 = tpu.matmul %12, %13, %cst_9 {dimension_numbers = #tpu.dot_dimension_numbers<[1], [0], [0], [1], [0, 0, 1, 1], [], []>} : vector<4x512xbf16>, vector<512x256xbf16>, vector<4x256xf32> -> vector<4x256xf32>
    %c0_10 = arith.constant 0 : index
    %c0_11 = arith.constant 0 : index
    %15 = vector.load %arg5[%c0_10, %c0_11] : memref<1x256xf32, #tpu.memory_space<vmem>>, vector<1x256xf32>
    %16 = vector.broadcast %15 : vector<1x256xf32> to vector<4x256xf32>
    %17 = arith.addf %14, %16 : vector<4x256xf32>
    %cst_12 = arith.constant 0.000000e+00 : f32
    %18 = vector.broadcast %cst_12 : f32 to vector<4x256xf32>
    %19 = arith.cmpf ogt, %17, %18 : vector<4x256xf32>
    %cst_13 = arith.constant 0.00999999977 : f32
    %20 = vector.broadcast %cst_13 : f32 to vector<4x256xf32>
    %21 = arith.mulf %20, %17 : vector<4x256xf32>
    %22 = arith.select %19, %17, %21 : vector<4x256xi1>, vector<4x256xf32>
    %23 = arith.truncf %22 : vector<4x256xf32> to vector<4x256xbf16>
    %c0_14 = arith.constant 0 : index
    %c0_15 = arith.constant 0 : index
    %24 = vector.load %arg6[%c0_14, %c0_15] : memref<256x64xbf16, #tpu.memory_space<vmem>>, vector<256x64xbf16>
    %cst_16 = arith.constant dense<0.000000e+00> : vector<4x64xf32>
    %25 = tpu.matmul %23, %24, %cst_16 {dimension_numbers = #tpu.dot_dimension_numbers<[1], [0], [0], [1], [0, 0, 1, 1], [], []>} : vector<4x256xbf16>, vector<256x64xbf16>, vector<4x64xf32> -> vector<4x64xf32>
    %c0_17 = arith.constant 0 : index
    %c0_18 = arith.constant 0 : index
    %26 = vector.load %arg7[%c0_17, %c0_18] : memref<1x64xf32, #tpu.memory_space<vmem>>, vector<1x64xf32>
    %27 = vector.broadcast %26 : vector<1x64xf32> to vector<4x64xf32>
    %28 = arith.addf %25, %27 : vector<4x64xf32>
    %cst_19 = arith.constant 0.000000e+00 : f32
    %29 = vector.broadcast %cst_19 : f32 to vector<4x64xf32>
    %30 = arith.cmpf ogt, %28, %29 : vector<4x64xf32>
    %cst_20 = arith.constant 0.00999999977 : f32
    %31 = vector.broadcast %cst_20 : f32 to vector<4x64xf32>
    %32 = arith.mulf %31, %28 : vector<4x64xf32>
    %33 = arith.select %30, %28, %32 : vector<4x64xi1>, vector<4x64xf32>
    %c0_21 = arith.constant 0 : index
    %c0_22 = arith.constant 0 : index
    %34 = vector.load %arg8[%c0_21, %c0_22] : memref<1x64xf32, #tpu.memory_space<vmem>>, vector<1x64xf32>
    %35 = vector.broadcast %34 : vector<1x64xf32> to vector<4x64xf32>
    %36 = arith.mulf %33, %35 : vector<4x64xf32>
    %cst_23 = arith.constant dense<0.000000e+00> : vector<4xf32>
    %37 = vector.multi_reduction <add>, %36, %cst_23 [1] : vector<4x64xf32> to vector<4xf32>
    %38 = vector.shape_cast %37 : vector<4xf32> to vector<4x1xf32>
    %c0_24 = arith.constant 0 : index
    %c0_25 = arith.constant 0 : index
    %39 = vector.load %arg9[%c0_24, %c0_25] : memref<1x1xf32, #tpu.memory_space<vmem>>, vector<1x1xf32>
    %40 = vector.broadcast %39 : vector<1x1xf32> to vector<4x1xf32>
    %41 = arith.addf %38, %40 : vector<4x1xf32>
    %cst_26 = arith.constant 0.000000e+00 : f32
    %42 = vector.broadcast %cst_26 : f32 to vector<4x1xf32>
    %43 = arith.subf %42, %41 : vector<4x1xf32>
    %44 = math.exp %43 : vector<4x1xf32>
    %cst_27 = arith.constant 1.000000e+00 : f32
    %45 = vector.broadcast %cst_27 : f32 to vector<4x1xf32>
    %46 = arith.addf %45, %44 : vector<4x1xf32>
    %47 = tpu.reciprocal %46 {approx = true} : vector<4x1xf32> -> vector<4x1xf32>
    %c0_28 = arith.constant 0 : index
    %c0_29 = arith.constant 0 : index
    %48 = vector.load %arg10[%c0_28, %c0_29] : memref<4x1xf32, #tpu.memory_space<vmem>>, vector<4x1xf32>
    tpu.vector_store %arg10[%c0_28, %c0_29], %47 {strides = array<i32>} : memref<4x1xf32, #tpu.memory_space<vmem>>, vector<4x1xf32>,
    return
  }
  func.func @transform_0(%arg0: i32) -> (i32, i32) {
    %c0_i32 = arith.constant 0 : i32
    %c0_i32_0 = arith.constant 0 : i32
    return %arg0, %c0_i32 : i32, i32
  }
  func.func @transform_1(%arg0: i32) -> (i32, i32) {
    %c0_i32 = arith.constant 0 : i32
    %c0_i32_0 = arith.constant 0 : i32
    %c0_i32_1 = arith.constant 0 : i32
    return %c0_i32, %c0_i32_0 : i32, i32
  }
  func.func @transform_2(%arg0: i32) -> (i32, i32) {
    %c0_i32 = arith.constant 0 : i32
    %c0_i32_0 = arith.constant 0 : i32
    %c0_i32_1 = arith.constant 0 : i32
    return %c0_i32, %c0_i32_0 : i32, i32
  }
  func.func @transform_3(%arg0: i32) -> (i32, i32) {
    %c0_i32 = arith.constant 0 : i32
    %c0_i32_0 = arith.constant 0 : i32
    %c0_i32_1 = arith.constant 0 : i32
    return %c0_i32, %c0_i32_0 : i32, i32
  }
  func.func @transform_4(%arg0: i32) -> (i32, i32) {
    %c0_i32 = arith.constant 0 : i32
    %c0_i32_0 = arith.constant 0 : i32
    %c0_i32_1 = arith.constant 0 : i32
    return %c0_i32, %c0_i32_0 : i32, i32
  }
  func.func @transform_5(%arg0: i32) -> (i32, i32) {
    %c0_i32 = arith.constant 0 : i32
    %c0_i32_0 = arith.constant 0 : i32
    %c0_i32_1 = arith.constant 0 : i32
    return %c0_i32, %c0_i32_0 : i32, i32
  }
  func.func @transform_6(%arg0: i32) -> (i32, i32) {
    %c0_i32 = arith.constant 0 : i32
    %c0_i32_0 = arith.constant 0 : i32
    %c0_i32_1 = arith.constant 0 : i32
    return %c0_i32, %c0_i32_0 : i32, i32
  }
  func.func @transform_7(%arg0: i32) -> (i32, i32) {
    %c0_i32 = arith.constant 0 : i32
    %c0_i32_0 = arith.constant 0 : i32
    %c0_i32_1 = arith.constant 0 : i32
    return %c0_i32, %c0_i32_0 : i32, i32
  }
  func.func @transform_8(%arg0: i32) -> (i32, i32) {
    %c0_i32 = arith.constant 0 : i32
    %c0_i32_0 = arith.constant 0 : i32
    %c0_i32_1 = arith.constant 0 : i32
    return %c0_i32, %c0_i32_0 : i32, i32
  }
  func.func @transform_9(%arg0: i32) -> (i32, i32) {
    %c0_i32 = arith.constant 0 : i32
    %c0_i32_0 = arith.constant 0 : i32
    return %arg0, %c0_i32 : i32, i32
  }
}

</mosaic_0001>

<llo_original>
// kernel: tpu_custom_call.1
$region0: #{tpu_custom_call.1}
  #allocation0 [shape = 'u32[]', space=smem, size = 0x4, offset = 0x4, fixed_abs, tag = 'smem constant byte address 0x4 - core index']
  #allocation1 [shape = 'u32[72,128]{1,0:T(1,128)}', space=vmem, size = 0x9000, scoped, tag = 'internal scratch']
  #allocation2 [shape = 'f32[1,1]{1,0:T(1,128)S(1)}', space=vmem, size = 0x200, scoped, tag = 'scoped memory for tpu_custom_call.1']
  %s0 = inlined_call_operand.hbm [shape: f32[4,1030], index: 0, kind: input, shape index: {}]
  %s1 = inlined_call_operand.hbm [shape: bf16[1030,512], index: 1, kind: input, shape index: {}]
  %s2 = inlined_call_operand.hbm [shape: f32[1,512], index: 2, kind: input, shape index: {}]
  %s3 = inlined_call_operand.hbm [shape: bf16[512,256], index: 3, kind: input, shape index: {}]
  %s4 = inlined_call_operand.hbm [shape: f32[1,256], index: 4, kind: input, shape index: {}]
  %s5 = inlined_call_operand.vmem [shape: bf16[256,64], index: 5, kind: input, shape index: {}]
  %s6 = inlined_call_operand.hbm [shape: f32[1,64], index: 6, kind: input, shape index: {}]
  %s7 = inlined_call_operand.hbm [shape: f32[1,64], index: 7, kind: input, shape index: {}]
  %s8 = inlined_call_operand.<no memory space> [shape: f32[1,1], index: 8, kind: input, shape index: {}]
  %s9 = inlined_call_operand.vmem [shape: f32[4,1], index: 9, kind: output, shape index: {}]
  %s10 = sld [smem:[#allocation0]]
  $region74: #{tpu_custom_call.1} parent=0
    _
  %s12 = ssub.s32 1, %s10
  %s13 = scalar_select 0, %s12, %s10
  %v14 = vstv %s8
  %15 = vst [vmem:[#allocation2] sm:$0x1] %v14
  $region1: #{tpu_custom_call.1} parent=0
    #allocation3 [shape = 'u8[18432]{0}', space=vmem, size = 0x4800, scoped, tag = 'input window, operand 0, single buffered']
    #allocation4 [shape = 's32[1]{0}', space=sflag, size = 0x4, scoped, tag = 'scoped memory for tpu_custom_call.1']
    #allocation5 [shape = 'u8[1056768]{0}', space=vmem, size = 0x102000, scoped, tag = 'input window, operand 1, single buffered']
    #allocation6 [shape = 's32[1]{0}', space=sflag, size = 0x4, scoped, tag = 'scoped memory for tpu_custom_call.1']
    #allocation7 [shape = 'u8[2048]{0}', space=vmem, size = 0x800, scoped, tag = 'input window, operand 2, single buffered']
    #allocation8 [shape = 'u8[262144]{0}', space=vmem, size = 0x40000, scoped, tag = 'input window, operand 3, single buffered']
    #allocation9 [shape = 's32[1]{0}', space=sflag, size = 0x4, scoped, tag = 'scoped memory for tpu_custom_call.1']
    #allocation10 [shape = 'u8[1024]{0}', space=vmem, size = 0x400, scoped, tag = 'input window, operand 4, single buffered']
    #allocation11 [shape = 'u8[512]{0}', space=vmem, size = 0x400, scoped, tag = 'input window, operand 6, single buffered']
    #allocation12 [shape = 's32[1]{0}', space=sflag, size = 0x4, scoped, tag = 'scoped memory for tpu_custom_call.1']
    #allocation13 [shape = 'u8[512]{0}', space=vmem, size = 0x400, scoped, tag = 'input window, operand 7, single buffered']
    %16 = vsyncpa [#allocation4], 0
    %17 = vsyncpa [#allocation6], 0
    %18 = vsyncpa [#allocation9], 0
    %19 = vsyncpa [#allocation12], 0
    // Predicated region
    $region2: #{tpu_custom_call.1} parent=1 // pred_check
      _
    $region3: #{tpu_custom_call.1} parent=1 // pred_check_branch
      %21 = sbr.rel (0) target = $region5
    $region4: #{tpu_custom_call.1} parent=1 // pred_region
      %23 = vsyncadd [#allocation4], 0
      %s25 = sshll.u32 %s0, 4
      %s26 = int_to_ptr.hbm [resolvable:$true] %s25
      %s27 = sshll.u32 [#allocation3], 4
      %s28 = int_to_ptr.vmem [resolvable:$true] %s27
      %30 = dma.hbm_to_vmem [thread:$0]  %s26, 576, %s28, [#allocation4]
    $region5: #{tpu_custom_call.1} parent=1 // pred_fallthru
      _
    // Predicated region
    $region6: #{tpu_custom_call.1} parent=1 // pred_check
      _
    $region7: #{tpu_custom_call.1} parent=1 // pred_check_branch
      %32 = sbr.rel (0) target = $region9
    $region8: #{tpu_custom_call.1} parent=1 // pred_region
      %34 = vsyncadd [#allocation6], 0
      %s35 = sshll.u32 %s1, 4
      %s36 = int_to_ptr.hbm [resolvable:$true] %s35
      %s37 = sshll.u32 [#allocation5], 4
      %s38 = int_to_ptr.vmem [resolvable:$true] %s37
      %43 = dma.hbm_to_vmem [thread:$0]  %s36, 33024, %s38, [#allocation6], 256, 256, 16
    $region9: #{tpu_custom_call.1} parent=1 // pred_fallthru
      _
    // Predicated region
    $region10: #{tpu_custom_call.1} parent=1 // pred_check
      _
    $region11: #{tpu_custom_call.1} parent=1 // pred_check_branch
      %45 = sbr.rel (0) target = $region13
    $region12: #{tpu_custom_call.1} parent=1 // pred_region
      %47 = vsyncadd [#allocation6], 0
      %s49 = sshll.u32 %s2, 4
      %s50 = int_to_ptr.hbm [resolvable:$true] %s49
      %s51 = sshll.u32 [#allocation7], 4
      %s52 = int_to_ptr.vmem [resolvable:$true] %s51
      %54 = dma.hbm_to_vmem [thread:$0]  %s50, 64, %s52, [#allocation6]
    $region13: #{tpu_custom_call.1} parent=1 // pred_fallthru
      _
    // Predicated region
    $region14: #{tpu_custom_call.1} parent=1 // pred_check
      _
    $region15: #{tpu_custom_call.1} parent=1 // pred_check_branch
      %56 = sbr.rel (0) target = $region17
    $region16: #{tpu_custom_call.1} parent=1 // pred_region
      %58 = vsyncadd [#allocation9], 0
      %s59 = sshll.u32 %s3, 4
      %s60 = int_to_ptr.hbm [resolvable:$true] %s59
      %s61 = sshll.u32 [#allocation8], 4
      %s62 = int_to_ptr.vmem [resolvable:$true] %s61
      %67 = dma.hbm_to_vmem [thread:$0]  %s60, 8192, %s62, [#allocation9], 128, 128, 8
    $region17: #{tpu_custom_call.1} parent=1 // pred_fallthru
      _
    // Predicated region
    $region18: #{tpu_custom_call.1} parent=1 // pred_check
      _
    $region19: #{tpu_custom_call.1} parent=1 // pred_check_branch
      %69 = sbr.rel (0) target = $region21
    $region20: #{tpu_custom_call.1} parent=1 // pred_region
      %71 = vsyncadd [#allocation9], 0
      %s73 = sshll.u32 %s4, 4
      %s74 = int_to_ptr.hbm [resolvable:$true] %s73
      %s75 = sshll.u32 [#allocation10], 4
      %s76 = int_to_ptr.vmem [resolvable:$true] %s75
      %78 = dma.hbm_to_vmem [thread:$0]  %s74, 32, %s76, [#allocation9]
    $region21: #{tpu_custom_call.1} parent=1 // pred_fallthru
      _
    // Predicated region
    $region22: #{tpu_custom_call.1} parent=1 // pred_check
      _
    $region23: #{tpu_custom_call.1} parent=1 // pred_check_branch
      %80 = sbr.rel (0) target = $region25
    $region24: #{tpu_custom_call.1} parent=1 // pred_region
      _
    $region25: #{tpu_custom_call.1} parent=1 // pred_fallthru
      _
    // Predicated region
    $region26: #{tpu_custom_call.1} parent=1 // pred_check
      _
    $region27: #{tpu_custom_call.1} parent=1 // pred_check_branch
      %82 = sbr.rel (0) target = $region29
    $region28: #{tpu_custom_call.1} parent=1 // pred_region
      %84 = vsyncadd [#allocation12], 0
      %s86 = sshll.u32 %s6, 4
      %s87 = int_to_ptr.hbm [resolvable:$true] %s86
      %s88 = sshll.u32 [#allocation11], 4
      %s89 = int_to_ptr.vmem [resolvable:$true] %s88
      %91 = dma.hbm_to_vmem [thread:$0]  %s87, 16, %s89, [#allocation12]
    $region29: #{tpu_custom_call.1} parent=1 // pred_fallthru
      _
    // Predicated region
    $region30: #{tpu_custom_call.1} parent=1 // pred_check
      _
    $region31: #{tpu_custom_call.1} parent=1 // pred_check_branch
      %93 = sbr.rel (0) target = $region33
    $region32: #{tpu_custom_call.1} parent=1 // pred_region
      %95 = vsyncadd [#allocation12], 0
      %s97 = sshll.u32 %s7, 4
      %s98 = int_to_ptr.hbm [resolvable:$true] %s97
      %s99 = sshll.u32 [#allocation13], 4
      %s100 = int_to_ptr.vmem [resolvable:$true] %s99
      %102 = dma.hbm_to_vmem [thread:$0]  %s98, 16, %s100, [#allocation12]
    $region33: #{tpu_custom_call.1} parent=1 // pred_fallthru
      _
    // Predicated region
    $region34: #{tpu_custom_call.1} parent=1 // pred_check
      _
    $region35: #{tpu_custom_call.1} parent=1 // pred_check_branch
      %104 = sbr.rel (0) target = $region37
    $region36: #{tpu_custom_call.1} parent=1 // pred_region
      _
    $region37: #{tpu_custom_call.1} parent=1 // pred_fallthru
      _
    // Predicated region
    $region38: #{tpu_custom_call.1} parent=1 // pred_check
      _
    $region39: #{tpu_custom_call.1} parent=1 // pred_check_branch
      %106 = sbr.rel (0) target = $region41
    $region40: #{tpu_custom_call.1} parent=1 // pred_region
      %108 = dma.done [#allocation4], 576
    $region41: #{tpu_custom_call.1} parent=1 // pred_fallthru
      _
    // Predicated region
    $region42: #{tpu_custom_call.1} parent=1 // pred_check
      _
    $region43: #{tpu_custom_call.1} parent=1 // pred_check_branch
      %110 = sbr.rel (0) target = $region45
    $region44: #{tpu_custom_call.1} parent=1 // pred_region
      %112 = dma.done [#allocation6], 33024
    $region45: #{tpu_custom_call.1} parent=1 // pred_fallthru
      _
    // Predicated region
    $region46: #{tpu_custom_call.1} parent=1 // pred_check
      _
    $region47: #{tpu_custom_call.1} parent=1 // pred_check_branch
      %114 = sbr.rel (0) target = $region49
    $region48: #{tpu_custom_call.1} parent=1 // pred_region
      %116 = dma.done [#allocation6], 64
    $region49: #{tpu_custom_call.1} parent=1 // pred_fallthru
      _
    // Predicated region
    $region50: #{tpu_custom_call.1} parent=1 // pred_check
      _
    $region51: #{tpu_custom_call.1} parent=1 // pred_check_branch
      %118 = sbr.rel (0) target = $region53
    $region52: #{tpu_custom_call.1} parent=1 // pred_region
      %120 = dma.done [#allocation9], 8192
    $region53: #{tpu_custom_call.1} parent=1 // pred_fallthru
      _
    // Predicated region
    $region54: #{tpu_custom_call.1} parent=1 // pred_check
      _
    $region55: #{tpu_custom_call.1} parent=1 // pred_check_branch
      %122 = sbr.rel (0) target = $region57
    $region56: #{tpu_custom_call.1} parent=1 // pred_region
      %124 = dma.done [#allocation9], 32
    $region57: #{tpu_custom_call.1} parent=1 // pred_fallthru
      _
    // Predicated region
    $region58: #{tpu_custom_call.1} parent=1 // pred_check
      _
    $region59: #{tpu_custom_call.1} parent=1 // pred_check_branch
      %126 = sbr.rel (0) target = $region61
    $region60: #{tpu_custom_call.1} parent=1 // pred_region
      %128 = dma.done [#allocation12], 16
    $region61: #{tpu_custom_call.1} parent=1 // pred_fallthru
      _
    // Predicated region
    $region62: #{tpu_custom_call.1} parent=1 // pred_check
      _
    $region63: #{tpu_custom_call.1} parent=1 // pred_check_branch
      %130 = sbr.rel (0) target = $region65
    $region64: #{tpu_custom_call.1} parent=1 // pred_region
      %132 = dma.done [#allocation12], 16
    $region65: #{tpu_custom_call.1} parent=1 // pred_fallthru
      _
    %v134 = vld [vmem:[#allocation3] sm:$0xff]
    %v135 = vld [vmem:[#allocation3 + $0x8] sm:$0xff]
    %v136 = vld [vmem:[#allocation3 + $0x10] sm:$0xff]
    %v137 = vld [vmem:[#allocation3 + $0x18] sm:$0xff]
    %v138 = vld [vmem:[#allocation3 + $0x20] sm:$0xf]
    %144 = vst [vmem:[#allocation1] ss:$2 sm:$0xff] %v134
    %s145 = scalar_lea.vmem [#allocation1], 16
    %146 = vst [vmem:[%s145] ss:$2 sm:$0xff] %v135
    %s147 = scalar_lea.vmem [#allocation1], 32
    %148 = vst [vmem:[%s147] ss:$2 sm:$0xff] %v136
    %s149 = scalar_lea.vmem [#allocation1], 48
    %150 = vst [vmem:[%s149] ss:$2 sm:$0xff] %v137
    %v151 = vld.sshfl [vmem:[#allocation1] sm:$0xff pattern:$0x75316420]
    %v152 = vld.sshfl [vmem:[#allocation1 + $0x8] sm:$0xff pattern:$0x75316420]
    %v153 = vld.sshfl [vmem:[#allocation1 + $0x10] sm:$0xff pattern:$0x75316420]
    %v154 = vld.sshfl [vmem:[#allocation1 + $0x18] sm:$0xff pattern:$0x75316420]
    %v155 = vld.sshfl [vmem:[#allocation1 + $0x20] sm:$0xff pattern:$0x75316420]
    %v156 = vld.sshfl [vmem:[#allocation1 + $0x28] sm:$0xff pattern:$0x75316420]
    %v157 = vld.sshfl [vmem:[#allocation1 + $0x30] sm:$0xff pattern:$0x75316420]
    %v158 = vld.sshfl [vmem:[#allocation1 + $0x38] sm:$0xff pattern:$0x75316420]
    %159 = vst [vmem:[#allocation1] ss:$2 sm:$0xff] %v138
    %v160 = vld.sshfl [vmem:[#allocation1] sm:$0xff pattern:$0x75316420]
    %v170 = vpack.c.bf16 %v151, %v151
    %v171 = vpack.c.bf16 %v152, %v152
    %v172 = vpack.c.bf16 %v153, %v153
    %v173 = vpack.c.bf16 %v154, %v154
    %v174 = vpack.c.bf16 %v155, %v155
    %v175 = vpack.c.bf16 %v156, %v156
    %v176 = vpack.c.bf16 %v157, %v157
    %v177 = vpack.c.bf16 %v158, %v158
    %v178 = vpack.c.bf16 %v160, %v160
    %v179 = vld [vmem:[#allocation5] sm:$0xff]
    %v180 = vld [vmem:[#allocation5 + $0x8] sm:$0xff]
    %v181 = vld [vmem:[#allocation5 + $0x10] sm:$0xff]
    %v182 = vld [vmem:[#allocation5 + $0x18] sm:$0xff]
    %v183 = vld [vmem:[#allocation5 + $0x20] sm:$0xff]
    %v184 = vld [vmem:[#allocation5 + $0x28] sm:$0xff]
    %v185 = vld [vmem:[#allocation5 + $0x30] sm:$0xff]
    %v186 = vld [vmem:[#allocation5 + $0x38] sm:$0xff]
    %v187 = vld [vmem:[#allocation5 + $0x40] sm:$0xff]
    %v188 = vld [vmem:[#allocation5 + $0x48] sm:$0xff]
    %v189 = vld [vmem:[#allocation5 + $0x50] sm:$0xff]
    %v190 = vld [vmem:[#allocation5 + $0x58] sm:$0xff]
    %v191 = vld [vmem:[#allocation5 + $0x60] sm:$0xff]
    %v192 = vld [vmem:[#allocation5 + $0x68] sm:$0xff]
    %v193 = vld [vmem:[#allocation5 + $0x70] sm:$0xff]
    %v194 = vld [vmem:[#allocation5 + $0x78] sm:$0xff]
    %v195 = vld [vmem:[#allocation5 + $0x80] sm:$0xff]
    %v196 = vld [vmem:[#allocation5 + $0x88] sm:$0xff]
    %v197 = vld [vmem:[#allocation5 + $0x90] sm:$0xff]
    %v198 = vld [vmem:[#allocation5 + $0x98] sm:$0xff]
    %v199 = vld [vmem:[#allocation5 + $0xa0] sm:$0xff]
    %v200 = vld [vmem:[#allocation5 + $0xa8] sm:$0xff]
    %v201 = vld [vmem:[#allocation5 + $0xb0] sm:$0xff]
    %v202 = vld [vmem:[#allocation5 + $0xb8] sm:$0xff]
    %v203 = vld [vmem:[#allocation5 + $0xc0] sm:$0xff]
    %v204 = vld [vmem:[#allocation5 + $0xc8] sm:$0xff]
    %v205 = vld [vmem:[#allocation5 + $0xd0] sm:$0xff]
    %v206 = vld [vmem:[#allocation5 + $0xd8] sm:$0xff]
    %v207 = vld [vmem:[#allocation5 + $0xe0] sm:$0xff]
    %v208 = vld [vmem:[#allocation5 + $0xe8] sm:$0xff]
    %v209 = vld [vmem:[#allocation5 + $0xf0] sm:$0xff]
    %v210 = vld [vmem:[#allocation5 + $0xf8] sm:$0xff]
    %v211 = vld [vmem:[#allocation5 + $0x100] sm:$0xff]
    %v212 = vld [vmem:[#allocation5 + $0x108] sm:$0xff]
    %v213 = vld [vmem:[#allocation5 + $0x110] sm:$0xff]
    %v214 = vld [vmem:[#allocation5 + $0x118] sm:$0xff]
    %v215 = vld [vmem:[#allocation5 + $0x120] sm:$0xff]
    %v216 = vld [vmem:[#allocation5 + $0x128] sm:$0xff]
    %v217 = vld [vmem:[#allocation5 + $0x130] sm:$0xff]
    %v218 = vld [vmem:[#allocation5 + $0x138] sm:$0xff]
    %v219 = vld [vmem:[#allocation5 + $0x140] sm:$0xff]
    %v220 = vld [vmem:[#allocation5 + $0x148] sm:$0xff]
    %v221 = vld [vmem:[#allocation5 + $0x150] sm:$0xff]
    %v222 = vld [vmem:[#allocation5 + $0x158] sm:$0xff]
    %v223 = vld [vmem:[#allocation5 + $0x160] sm:$0xff]
    %v224 = vld [vmem:[#allocation5 + $0x168] sm:$0xff]
    %v225 = vld [vmem:[#allocation5 + $0x170] sm:$0xff]
    %v226 = vld [vmem:[#allocation5 + $0x178] sm:$0xff]
    %v227 = vld [vmem:[#allocation5 + $0x180] sm:$0xff]
    %v228 = vld [vmem:[#allocation5 + $0x188] sm:$0xff]
    %v229 = vld [vmem:[#allocation5 + $0x190] sm:$0xff]
    %v230 = vld [vmem:[#allocation5 + $0x198] sm:$0xff]
    %v231 = vld [vmem:[#allocation5 + $0x1a0] sm:$0xff]
    %v232 = vld [vmem:[#allocation5 + $0x1a8] sm:$0xff]
    %v233 = vld [vmem:[#allocation5 + $0x1b0] sm:$0xff]
    %v234 = vld [vmem:[#allocation5 + $0x1b8] sm:$0xff]
    %v235 = vld [vmem:[#allocation5 + $0x1c0] sm:$0xff]
    %v236 = vld [vmem:[#allocation5 + $0x1c8] sm:$0xff]
    %v237 = vld [vmem:[#allocation5 + $0x1d0] sm:$0xff]
    %v238 = vld [vmem:[#allocation5 + $0x1d8] sm:$0xff]
    %v239 = vld [vmem:[#allocation5 + $0x1e0] sm:$0xff]
    %v240 = vld [vmem:[#allocation5 + $0x1e8] sm:$0xff]
    %v241 = vld [vmem:[#allocation5 + $0x1f0] sm:$0xff]
    %v242 = vld [vmem:[#allocation5 + $0x1f8] sm:$0xff]
    %v243 = vld [vmem:[#allocation5 + $0x200] sm:$0xff]
    %v244 = vld [vmem:[#allocation5 + $0x208] sm:$0xff]
    %v245 = vld [vmem:[#allocation5 + $0x210] sm:$0xff]
    %v246 = vld [vmem:[#allocation5 + $0x218] sm:$0xff]
    %v247 = vld [vmem:[#allocation5 + $0x220] sm:$0xff]
    %v248 = vld [vmem:[#allocation5 + $0x228] sm:$0xff]
    %v249 = vld [vmem:[#allocation5 + $0x230] sm:$0xff]
    %v250 = vld [vmem:[#allocation5 + $0x238] sm:$0xff]
    %v251 = vld [vmem:[#allocation5 + $0x240] sm:$0xff]
    %v252 = vld [vmem:[#allocation5 + $0x248] sm:$0xff]
    %v253 = vld [vmem:[#allocation5 + $0x250] sm:$0xff]
    %v254 = vld [vmem:[#allocation5 + $0x258] sm:$0xff]
    %v255 = vld [vmem:[#allocation5 + $0x260] sm:$0xff]
    %v256 = vld [vmem:[#allocation5 + $0x268] sm:$0xff]
    %v257 = vld [vmem:[#allocation5 + $0x270] sm:$0xff]
    %v258 = vld [vmem:[#allocation5 + $0x278] sm:$0xff]
    %v259 = vld [vmem:[#allocation5 + $0x280] sm:$0xff]
    %v260 = vld [vmem:[#allocation5 + $0x288] sm:$0xff]
    %v261 = vld [vmem:[#allocation5 + $0x290] sm:$0xff]
    %v262 = vld [vmem:[#allocation5 + $0x298] sm:$0xff]
    %v263 = vld [vmem:[#allocation5 + $0x2a0] sm:$0xff]
    %v264 = vld [vmem:[#allocation5 + $0x2a8] sm:$0xff]
    %v265 = vld [vmem:[#allocation5 + $0x2b0] sm:$0xff]
    %v266 = vld [vmem:[#allocation5 + $0x2b8] sm:$0xff]
    %v267 = vld [vmem:[#allocation5 + $0x2c0] sm:$0xff]
    %v268 = vld [vmem:[#allocation5 + $0x2c8] sm:$0xff]
    %v269 = vld [vmem:[#allocation5 + $0x2d0] sm:$0xff]
    %v270 = vld [vmem:[#allocation5 + $0x2d8] sm:$0xff]
    %v271 = vld [vmem:[#allocation5 + $0x2e0] sm:$0xff]
    %v272 = vld [vmem:[#allocation5 + $0x2e8] sm:$0xff]
    %v273 = vld [vmem:[#allocation5 + $0x2f0] sm:$0xff]
    %v274 = vld [vmem:[#allocation5 + $0x2f8] sm:$0xff]
    %v275 = vld [vmem:[#allocation5 + $0x300] sm:$0xff]
    %v276 = vld [vmem:[#allocation5 + $0x308] sm:$0xff]
    %v277 = vld [vmem:[#allocation5 + $0x310] sm:$0xff]
    %v278 = vld [vmem:[#allocation5 + $0x318] sm:$0xff]
    %v279 = vld [vmem:[#allocation5 + $0x320] sm:$0xff]
    %v280 = vld [vmem:[#allocation5 + $0x328] sm:$0xff]
    %v281 = vld [vmem:[#allocation5 + $0x330] sm:$0xff]
    %v282 = vld [vmem:[#allocation5 + $0x338] sm:$0xff]
    %v283 = vld [vmem:[#allocation5 + $0x340] sm:$0xff]
    %v284 = vld [vmem:[#allocation5 + $0x348] sm:$0xff]
    %v285 = vld [vmem:[#allocation5 + $0x350] sm:$0xff]
    %v286 = vld [vmem:[#allocation5 + $0x358] sm:$0xff]
    %v287 = vld [vmem:[#allocation5 + $0x360] sm:$0xff]
    %v288 = vld [vmem:[#allocation5 + $0x368] sm:$0xff]
    %v289 = vld [vmem:[#allocation5 + $0x370] sm:$0xff]
    %v290 = vld [vmem:[#allocation5 + $0x378] sm:$0xff]
    %v291 = vld [vmem:[#allocation5 + $0x380] sm:$0xff]
    %v292 = vld [vmem:[#allocation5 + $0x388] sm:$0xff]
    %v293 = vld [vmem:[#allocation5 + $0x390] sm:$0xff]
    %v294 = vld [vmem:[#allocation5 + $0x398] sm:$0xff]
    %v295 = vld [vmem:[#allocation5 + $0x3a0] sm:$0xff]
    %v296 = vld [vmem:[#allocation5 + $0x3a8] sm:$0xff]
    %v297 = vld [vmem:[#allocation5 + $0x3b0] sm:$0xff]
    %v298 = vld [vmem:[#allocation5 + $0x3b8] sm:$0xff]
    %v299 = vld [vmem:[#allocation5 + $0x3c0] sm:$0xff]
    %v300 = vld [vmem:[#allocation5 + $0x3c8] sm:$0xff]
    %v301 = vld [vmem:[#allocation5 + $0x3d0] sm:$0xff]
    %v302 = vld [vmem:[#allocation5 + $0x3d8] sm:$0xff]
    %v303 = vld [vmem:[#allocation5 + $0x3e0] sm:$0xff]
    %v304 = vld [vmem:[#allocation5 + $0x3e8] sm:$0xff]
    %v305 = vld [vmem:[#allocation5 + $0x3f0] sm:$0xff]
    %v306 = vld [vmem:[#allocation5 + $0x3f8] sm:$0xff]
    %v307 = vld [vmem:[#allocation5 + $0x400] sm:$0xff]
    %v308 = vld [vmem:[#allocation5 + $0x408] sm:$0xff]
    %v309 = vld [vmem:[#allocation5 + $0x410] sm:$0xff]
    %v310 = vld [vmem:[#allocation5 + $0x418] sm:$0xff]
    %v311 = vld [vmem:[#allocation5 + $0x420] sm:$0xff]
    %v312 = vld [vmem:[#allocation5 + $0x428] sm:$0xff]
    %v313 = vld [vmem:[#allocation5 + $0x430] sm:$0xff]
    %v314 = vld [vmem:[#allocation5 + $0x438] sm:$0xff]
    %v315 = vld [vmem:[#allocation5 + $0x440] sm:$0xff]
    %v316 = vld [vmem:[#allocation5 + $0x448] sm:$0xff]
    %v317 = vld [vmem:[#allocation5 + $0x450] sm:$0xff]
    %v318 = vld [vmem:[#allocation5 + $0x458] sm:$0xff]
    %v319 = vld [vmem:[#allocation5 + $0x460] sm:$0xff]
    %v320 = vld [vmem:[#allocation5 + $0x468] sm:$0xff]
    %v321 = vld [vmem:[#allocation5 + $0x470] sm:$0xff]
    %v322 = vld [vmem:[#allocation5 + $0x478] sm:$0xff]
    %v323 = vld [vmem:[#allocation5 + $0x480] sm:$0xff]
    %v324 = vld [vmem:[#allocation5 + $0x488] sm:$0xff]
    %v325 = vld [vmem:[#allocation5 + $0x490] sm:$0xff]
    %v326 = vld [vmem:[#allocation5 + $0x498] sm:$0xff]
    %v327 = vld [vmem:[#allocation5 + $0x4a0] sm:$0xff]
    %v328 = vld [vmem:[#allocation5 + $0x4a8] sm:$0xff]
    %v329 = vld [vmem:[#allocation5 + $0x4b0] sm:$0xff]
    %v330 = vld [vmem:[#allocation5 + $0x4b8] sm:$0xff]
    %v331 = vld [vmem:[#allocation5 + $0x4c0] sm:$0xff]
    %v332 = vld [vmem:[#allocation5 + $0x4c8] sm:$0xff]
    %v333 = vld [vmem:[#allocation5 + $0x4d0] sm:$0xff]
    %v334 = vld [vmem:[#allocation5 + $0x4d8] sm:$0xff]
    %v335 = vld [vmem:[#allocation5 + $0x4e0] sm:$0xff]
    %v336 = vld [vmem:[#allocation5 + $0x4e8] sm:$0xff]
    %v337 = vld [vmem:[#allocation5 + $0x4f0] sm:$0xff]
    %v338 = vld [vmem:[#allocation5 + $0x4f8] sm:$0xff]
    %v339 = vld [vmem:[#allocation5 + $0x500] sm:$0xff]
    %v340 = vld [vmem:[#allocation5 + $0x508] sm:$0xff]
    %v341 = vld [vmem:[#allocation5 + $0x510] sm:$0xff]
    %v342 = vld [vmem:[#allocation5 + $0x518] sm:$0xff]
    %v343 = vld [vmem:[#allocation5 + $0x520] sm:$0xff]
    %v344 = vld [vmem:[#allocation5 + $0x528] sm:$0xff]
    %v345 = vld [vmem:[#allocation5 + $0x530] sm:$0xff]
    %v346 = vld [vmem:[#allocation5 + $0x538] sm:$0xff]
    %v347 = vld [vmem:[#allocation5 + $0x540] sm:$0xff]
    %v348 = vld [vmem:[#allocation5 + $0x548] sm:$0xff]
    %v349 = vld [vmem:[#allocation5 + $0x550] sm:$0xff]
    %v350 = vld [vmem:[#allocation5 + $0x558] sm:$0xff]
    %v351 = vld [vmem:[#allocation5 + $0x560] sm:$0xff]
    %v352 = vld [vmem:[#allocation5 + $0x568] sm:$0xff]
    %v353 = vld [vmem:[#allocation5 + $0x570] sm:$0xff]
    %v354 = vld [vmem:[#allocation5 + $0x578] sm:$0xff]
    %v355 = vld [vmem:[#allocation5 + $0x580] sm:$0xff]
    %v356 = vld [vmem:[#allocation5 + $0x588] sm:$0xff]
    %v357 = vld [vmem:[#allocation5 + $0x590] sm:$0xff]
    %v358 = vld [vmem:[#allocation5 + $0x598] sm:$0xff]
    %v359 = vld [vmem:[#allocation5 + $0x5a0] sm:$0xff]
    %v360 = vld [vmem:[#allocation5 + $0x5a8] sm:$0xff]
    %v361 = vld [vmem:[#allocation5 + $0x5b0] sm:$0xff]
    %v362 = vld [vmem:[#allocation5 + $0x5b8] sm:$0xff]
    %v363 = vld [vmem:[#allocation5 + $0x5c0] sm:$0xff]
    %v364 = vld [vmem:[#allocation5 + $0x5c8] sm:$0xff]
    %v365 = vld [vmem:[#allocation5 + $0x5d0] sm:$0xff]
    %v366 = vld [vmem:[#allocation5 + $0x5d8] sm:$0xff]
    %v367 = vld [vmem:[#allocation5 + $0x5e0] sm:$0xff]
    %v368 = vld [vmem:[#allocation5 + $0x5e8] sm:$0xff]
    %v369 = vld [vmem:[#allocation5 + $0x5f0] sm:$0xff]
    %v370 = vld [vmem:[#allocation5 + $0x5f8] sm:$0xff]
    %v371 = vld [vmem:[#allocation5 + $0x600] sm:$0xff]
    %v372 = vld [vmem:[#allocation5 + $0x608] sm:$0xff]
    %v373 = vld [vmem:[#allocation5 + $0x610] sm:$0xff]
    %v374 = vld [vmem:[#allocation5 + $0x618] sm:$0xff]
    %v375 = vld [vmem:[#allocation5 + $0x620] sm:$0xff]
    %v376 = vld [vmem:[#allocation5 + $0x628] sm:$0xff]
    %v377 = vld [vmem:[#allocation5 + $0x630] sm:$0xff]
    %v378 = vld [vmem:[#allocation5 + $0x638] sm:$0xff]
    %v379 = vld [vmem:[#allocation5 + $0x640] sm:$0xff]
    %v380 = vld [vmem:[#allocation5 + $0x648] sm:$0xff]
    %v381 = vld [vmem:[#allocation5 + $0x650] sm:$0xff]
    %v382 = vld [vmem:[#allocation5 + $0x658] sm:$0xff]
    %v383 = vld [vmem:[#allocation5 + $0x660] sm:$0xff]
    %v384 = vld [vmem:[#allocation5 + $0x668] sm:$0xff]
    %v385 = vld [vmem:[#allocation5 + $0x670] sm:$0xff]
    %v386 = vld [vmem:[#allocation5 + $0x678] sm:$0xff]
    %v387 = vld [vmem:[#allocation5 + $0x680] sm:$0xff]
    %v388 = vld [vmem:[#allocation5 + $0x688] sm:$0xff]
    %v389 = vld [vmem:[#allocation5 + $0x690] sm:$0xff]
    %v390 = vld [vmem:[#allocation5 + $0x698] sm:$0xff]
    %v391 = vld [vmem:[#allocation5 + $0x6a0] sm:$0xff]
    %v392 = vld [vmem:[#allocation5 + $0x6a8] sm:$0xff]
    %v393 = vld [vmem:[#allocation5 + $0x6b0] sm:$0xff]
    %v394 = vld [vmem:[#allocation5 + $0x6b8] sm:$0xff]
    %v395 = vld [vmem:[#allocation5 + $0x6c0] sm:$0xff]
    %v396 = vld [vmem:[#allocation5 + $0x6c8] sm:$0xff]
    %v397 = vld [vmem:[#allocation5 + $0x6d0] sm:$0xff]
    %v398 = vld [vmem:[#allocation5 + $0x6d8] sm:$0xff]
    %v399 = vld [vmem:[#allocation5 + $0x6e0] sm:$0xff]
    %v400 = vld [vmem:[#allocation5 + $0x6e8] sm:$0xff]
    %v401 = vld [vmem:[#allocation5 + $0x6f0] sm:$0xff]
    %v402 = vld [vmem:[#allocation5 + $0x6f8] sm:$0xff]
    %v403 = vld [vmem:[#allocation5 + $0x700] sm:$0xff]
    %v404 = vld [vmem:[#allocation5 + $0x708] sm:$0xff]
    %v405 = vld [vmem:[#allocation5 + $0x710] sm:$0xff]
    %v406 = vld [vmem:[#allocation5 + $0x718] sm:$0xff]
    %v407 = vld [vmem:[#allocation5 + $0x720] sm:$0xff]
    %v408 = vld [vmem:[#allocation5 + $0x728] sm:$0xff]
    %v409 = vld [vmem:[#allocation5 + $0x730] sm:$0xff]
    %v410 = vld [vmem:[#allocation5 + $0x738] sm:$0xff]
    %v411 = vld [vmem:[#allocation5 + $0x740] sm:$0xff]
    %v412 = vld [vmem:[#allocation5 + $0x748] sm:$0xff]
    %v413 = vld [vmem:[#allocation5 + $0x750] sm:$0xff]
    %v414 = vld [vmem:[#allocation5 + $0x758] sm:$0xff]
    %v415 = vld [vmem:[#allocation5 + $0x760] sm:$0xff]
    %v416 = vld [vmem:[#allocation5 + $0x768] sm:$0xff]
    %v417 = vld [vmem:[#allocation5 + $0x770] sm:$0xff]
    %v418 = vld [vmem:[#allocation5 + $0x778] sm:$0xff]
    %v419 = vld [vmem:[#allocation5 + $0x780] sm:$0xff]
    %v420 = vld [vmem:[#allocation5 + $0x788] sm:$0xff]
    %v421 = vld [vmem:[#allocation5 + $0x790] sm:$0xff]
    %v422 = vld [vmem:[#allocation5 + $0x798] sm:$0xff]
    %v423 = vld [vmem:[#allocation5 + $0x7a0] sm:$0xff]
    %v424 = vld [vmem:[#allocation5 + $0x7a8] sm:$0xff]
    %v425 = vld [vmem:[#allocation5 + $0x7b0] sm:$0xff]
    %v426 = vld [vmem:[#allocation5 + $0x7b8] sm:$0xff]
    %v427 = vld [vmem:[#allocation5 + $0x7c0] sm:$0xff]
    %v428 = vld [vmem:[#allocation5 + $0x7c8] sm:$0xff]
    %v429 = vld [vmem:[#allocation5 + $0x7d0] sm:$0xff]
    %v430 = vld [vmem:[#allocation5 + $0x7d8] sm:$0xff]
    %v431 = vld [vmem:[#allocation5 + $0x7e0] sm:$0xff]
    %v432 = vld [vmem:[#allocation5 + $0x7e8] sm:$0xff]
    %v433 = vld [vmem:[#allocation5 + $0x7f0] sm:$0xff]
    %v434 = vld [vmem:[#allocation5 + $0x7f8] sm:$0xff]
    %v435 = vld [vmem:[#allocation5 + $0x800] sm:$0x77]
    %v436 = vld [vmem:[#allocation5 + $0x808] sm:$0x77]
    %v437 = vld [vmem:[#allocation7] sm:$0xf]
    %v439 = vperm.slane %v437, 0
    %v440 = vperm.slane %v437, 1
    %v441 = vperm.slane %v437, 2
    %v442 = vperm.slane %v437, 3
    %v705 = vunpack.c.l.b16 %v179
    %v706 = vunpack.c.h.b16 %v179
    %v707 = vunpack.c.l.b16 %v180
    %v708 = vunpack.c.h.b16 %v180
    %v709 = vunpack.c.l.b16 %v181
    %v710 = vunpack.c.h.b16 %v181
    %v711 = vunpack.c.l.b16 %v182
    %v712 = vunpack.c.h.b16 %v182
    %v713 = vunpack.c.l.b16 %v183
    %v714 = vunpack.c.h.b16 %v183
    %v715 = vunpack.c.l.b16 %v184
    %v716 = vunpack.c.h.b16 %v184
    %v717 = vunpack.c.l.b16 %v185
    %v718 = vunpack.c.h.b16 %v185
    %v719 = vunpack.c.l.b16 %v186
    %v720 = vunpack.c.h.b16 %v186
    %v721 = vunpack.c.l.b16 %v187
    %v722 = vunpack.c.h.b16 %v187
    %v723 = vunpack.c.l.b16 %v188
    %v724 = vunpack.c.h.b16 %v188
    %v725 = vunpack.c.l.b16 %v189
    %v726 = vunpack.c.h.b16 %v189
    %v727 = vunpack.c.l.b16 %v190
    %v728 = vunpack.c.h.b16 %v190
    %v729 = vunpack.c.l.b16 %v191
    %v730 = vunpack.c.h.b16 %v191
    %v731 = vunpack.c.l.b16 %v192
    %v732 = vunpack.c.h.b16 %v192
    %v733 = vunpack.c.l.b16 %v193
    %v734 = vunpack.c.h.b16 %v193
    %v735 = vunpack.c.l.b16 %v194
    %v736 = vunpack.c.h.b16 %v194
    %v737 = vunpack.c.l.b16 %v195
    %v738 = vunpack.c.h.b16 %v195
    %v739 = vunpack.c.l.b16 %v196
    %v740 = vunpack.c.h.b16 %v196
    %v741 = vunpack.c.l.b16 %v197
    %v742 = vunpack.c.h.b16 %v197
    %v743 = vunpack.c.l.b16 %v198
    %v744 = vunpack.c.h.b16 %v198
    %v745 = vunpack.c.l.b16 %v199
    %v746 = vunpack.c.h.b16 %v199
    %v747 = vunpack.c.l.b16 %v200
    %v748 = vunpack.c.h.b16 %v200
    %v749 = vunpack.c.l.b16 %v201
    %v750 = vunpack.c.h.b16 %v201
    %v751 = vunpack.c.l.b16 %v202
    %v752 = vunpack.c.h.b16 %v202
    %v753 = vunpack.c.l.b16 %v203
    %v754 = vunpack.c.h.b16 %v203
    %v755 = vunpack.c.l.b16 %v204
    %v756 = vunpack.c.h.b16 %v204
    %v757 = vunpack.c.l.b16 %v205
    %v758 = vunpack.c.h.b16 %v205
    %v759 = vunpack.c.l.b16 %v206
    %v760 = vunpack.c.h.b16 %v206
    %v761 = vunpack.c.l.b16 %v207
    %v762 = vunpack.c.h.b16 %v207
    %v763 = vunpack.c.l.b16 %v208
    %v764 = vunpack.c.h.b16 %v208
    %v765 = vunpack.c.l.b16 %v209
    %v766 = vunpack.c.h.b16 %v209
    %v767 = vunpack.c.l.b16 %v210
    %v768 = vunpack.c.h.b16 %v210
    %v769 = vunpack.c.l.b16 %v211
    %v770 = vunpack.c.h.b16 %v211
    %v771 = vunpack.c.l.b16 %v212
    %v772 = vunpack.c.h.b16 %v212
    %v773 = vunpack.c.l.b16 %v213
    %v774 = vunpack.c.h.b16 %v213
    %v775 = vunpack.c.l.b16 %v214
    %v776 = vunpack.c.h.b16 %v214
    %v777 = vunpack.c.l.b16 %v215
    %v778 = vunpack.c.h.b16 %v215
    %v779 = vunpack.c.l.b16 %v216
    %v780 = vunpack.c.h.b16 %v216
    %v781 = vunpack.c.l.b16 %v217
    %v782 = vunpack.c.h.b16 %v217
    %v783 = vunpack.c.l.b16 %v218
    %v784 = vunpack.c.h.b16 %v218
    %v785 = vunpack.c.l.b16 %v219
    %v786 = vunpack.c.h.b16 %v219
    %v787 = vunpack.c.l.b16 %v220
    %v788 = vunpack.c.h.b16 %v220
    %v789 = vunpack.c.l.b16 %v221
    %v790 = vunpack.c.h.b16 %v221
    %v791 = vunpack.c.l.b16 %v222
    %v792 = vunpack.c.h.b16 %v222
    %v793 = vunpack.c.l.b16 %v223
    %v794 = vunpack.c.h.b16 %v223
    %v795 = vunpack.c.l.b16 %v224
    %v796 = vunpack.c.h.b16 %v224
    %v797 = vunpack.c.l.b16 %v225
    %v798 = vunpack.c.h.b16 %v225
    %v799 = vunpack.c.l.b16 %v226
    %v800 = vunpack.c.h.b16 %v226
    %v801 = vunpack.c.l.b16 %v227
    %v802 = vunpack.c.h.b16 %v227
    %v803 = vunpack.c.l.b16 %v228
    %v804 = vunpack.c.h.b16 %v228
    %v805 = vunpack.c.l.b16 %v229
    %v806 = vunpack.c.h.b16 %v229
    %v807 = vunpack.c.l.b16 %v230
    %v808 = vunpack.c.h.b16 %v230
    %v809 = vunpack.c.l.b16 %v231
    %v810 = vunpack.c.h.b16 %v231
    %v811 = vunpack.c.l.b16 %v232
    %v812 = vunpack.c.h.b16 %v232
    %v813 = vunpack.c.l.b16 %v233
    %v814 = vunpack.c.h.b16 %v233
    %v815 = vunpack.c.l.b16 %v234
    %v816 = vunpack.c.h.b16 %v234
    %v817 = vunpack.c.l.b16 %v235
    %v818 = vunpack.c.h.b16 %v235
    %v819 = vunpack.c.l.b16 %v236
    %v820 = vunpack.c.h.b16 %v236
    %v821 = vunpack.c.l.b16 %v237
    %v822 = vunpack.c.h.b16 %v237
    %v823 = vunpack.c.l.b16 %v238
    %v824 = vunpack.c.h.b16 %v238
    %v825 = vunpack.c.l.b16 %v239
    %v826 = vunpack.c.h.b16 %v239
    %v827 = vunpack.c.l.b16 %v240
    %v828 = vunpack.c.h.b16 %v240
    %v829 = vunpack.c.l.b16 %v241
    %v830 = vunpack.c.h.b16 %v241
    %v831 = vunpack.c.l.b16 %v242
    %v832 = vunpack.c.h.b16 %v242
    %v833 = vunpack.c.l.b16 %v243
    %v834 = vunpack.c.h.b16 %v243
    %v835 = vunpack.c.l.b16 %v244
    %v836 = vunpack.c.h.b16 %v244
    %v837 = vunpack.c.l.b16 %v245
    %v838 = vunpack.c.h.b16 %v245
    %v839 = vunpack.c.l.b16 %v246
    %v840 = vunpack.c.h.b16 %v246
    %v841 = vunpack.c.l.b16 %v247
    %v842 = vunpack.c.h.b16 %v247
    %v843 = vunpack.c.l.b16 %v248
    %v844 = vunpack.c.h.b16 %v248
    %v845 = vunpack.c.l.b16 %v249
    %v846 = vunpack.c.h.b16 %v249
    %v847 = vunpack.c.l.b16 %v250
    %v848 = vunpack.c.h.b16 %v250
    %v849 = vunpack.c.l.b16 %v251
    %v850 = vunpack.c.h.b16 %v251
    %v851 = vunpack.c.l.b16 %v252
    %v852 = vunpack.c.h.b16 %v252
    %v853 = vunpack.c.l.b16 %v253
    %v854 = vunpack.c.h.b16 %v253
    %v855 = vunpack.c.l.b16 %v254
    %v856 = vunpack.c.h.b16 %v254
    %v857 = vunpack.c.l.b16 %v255
    %v858 = vunpack.c.h.b16 %v255
    %v859 = vunpack.c.l.b16 %v256
    %v860 = vunpack.c.h.b16 %v256
    %v861 = vunpack.c.l.b16 %v257
    %v862 = vunpack.c.h.b16 %v257
    %v863 = vunpack.c.l.b16 %v258
    %v864 = vunpack.c.h.b16 %v258
    %v865 = vunpack.c.l.b16 %v259
    %v866 = vunpack.c.h.b16 %v259
    %v867 = vunpack.c.l.b16 %v260
    %v868 = vunpack.c.h.b16 %v260
    %v869 = vunpack.c.l.b16 %v261
    %v870 = vunpack.c.h.b16 %v261
    %v871 = vunpack.c.l.b16 %v262
    %v872 = vunpack.c.h.b16 %v262
    %v873 = vunpack.c.l.b16 %v263
    %v874 = vunpack.c.h.b16 %v263
    %v875 = vunpack.c.l.b16 %v264
    %v876 = vunpack.c.h.b16 %v264
    %v877 = vunpack.c.l.b16 %v265
    %v878 = vunpack.c.h.b16 %v265
    %v879 = vunpack.c.l.b16 %v266
    %v880 = vunpack.c.h.b16 %v266
    %v881 = vunpack.c.l.b16 %v267
    %v882 = vunpack.c.h.b16 %v267
    %v883 = vunpack.c.l.b16 %v268
    %v884 = vunpack.c.h.b16 %v268
    %v885 = vunpack.c.l.b16 %v269
    %v886 = vunpack.c.h.b16 %v269
    %v887 = vunpack.c.l.b16 %v270
    %v888 = vunpack.c.h.b16 %v270
    %v889 = vunpack.c.l.b16 %v271
    %v890 = vunpack.c.h.b16 %v271
    %v891 = vunpack.c.l.b16 %v272
    %v892 = vunpack.c.h.b16 %v272
    %v893 = vunpack.c.l.b16 %v273
    %v894 = vunpack.c.h.b16 %v273
    %v895 = vunpack.c.l.b16 %v274
    %v896 = vunpack.c.h.b16 %v274
    %v897 = vunpack.c.l.b16 %v275
    %v898 = vunpack.c.h.b16 %v275
    %v899 = vunpack.c.l.b16 %v276
    %v900 = vunpack.c.h.b16 %v276
    %v901 = vunpack.c.l.b16 %v277
    %v902 = vunpack.c.h.b16 %v277
    %v903 = vunpack.c.l.b16 %v278
    %v904 = vunpack.c.h.b16 %v278
    %v905 = vunpack.c.l.b16 %v279
    %v906 = vunpack.c.h.b16 %v279
    %v907 = vunpack.c.l.b16 %v280
    %v908 = vunpack.c.h.b16 %v280
    %v909 = vunpack.c.l.b16 %v281
    %v910 = vunpack.c.h.b16 %v281
    %v911 = vunpack.c.l.b16 %v282
    %v912 = vunpack.c.h.b16 %v282
    %v913 = vunpack.c.l.b16 %v283
    %v914 = vunpack.c.h.b16 %v283
    %v915 = vunpack.c.l.b16 %v284
    %v916 = vunpack.c.h.b16 %v284
    %v917 = vunpack.c.l.b16 %v285
    %v918 = vunpack.c.h.b16 %v285
    %v919 = vunpack.c.l.b16 %v286
    %v920 = vunpack.c.h.b16 %v286
    %v921 = vunpack.c.l.b16 %v287
    %v922 = vunpack.c.h.b16 %v287
    %v923 = vunpack.c.l.b16 %v288
    %v924 = vunpack.c.h.b16 %v288
    %v925 = vunpack.c.l.b16 %v289
    %v926 = vunpack.c.h.b16 %v289
    %v927 = vunpack.c.l.b16 %v290
    %v928 = vunpack.c.h.b16 %v290
    %v929 = vunpack.c.l.b16 %v291
    %v930 = vunpack.c.h.b16 %v291
    %v931 = vunpack.c.l.b16 %v292
    %v932 = vunpack.c.h.b16 %v292
    %v933 = vunpack.c.l.b16 %v293
    %v934 = vunpack.c.h.b16 %v293
    %v935 = vunpack.c.l.b16 %v294
    %v936 = vunpack.c.h.b16 %v294
    %v937 = vunpack.c.l.b16 %v295
    %v938 = vunpack.c.h.b16 %v295
    %v939 = vunpack.c.l.b16 %v296
    %v940 = vunpack.c.h.b16 %v296
    %v941 = vunpack.c.l.b16 %v297
    %v942 = vunpack.c.h.b16 %v297
    %v943 = vunpack.c.l.b16 %v298
    %v944 = vunpack.c.h.b16 %v298
    %v945 = vunpack.c.l.b16 %v299
    %v946 = vunpack.c.h.b16 %v299
    %v947 = vunpack.c.l.b16 %v300
    %v948 = vunpack.c.h.b16 %v300
    %v949 = vunpack.c.l.b16 %v301
    %v950 = vunpack.c.h.b16 %v301
    %v951 = vunpack.c.l.b16 %v302
    %v952 = vunpack.c.h.b16 %v302
    %v953 = vunpack.c.l.b16 %v303
    %v954 = vunpack.c.h.b16 %v303
    %v955 = vunpack.c.l.b16 %v304
    %v956 = vunpack.c.h.b16 %v304
    %v957 = vunpack.c.l.b16 %v305
    %v958 = vunpack.c.h.b16 %v305
    %v959 = vunpack.c.l.b16 %v306
    %v960 = vunpack.c.h.b16 %v306
    %v961 = vunpack.c.l.b16 %v307
    %v962 = vunpack.c.h.b16 %v307
    %v963 = vunpack.c.l.b16 %v308
    %v964 = vunpack.c.h.b16 %v308
    %v965 = vunpack.c.l.b16 %v309
    %v966 = vunpack.c.h.b16 %v309
    %v967 = vunpack.c.l.b16 %v310
    %v968 = vunpack.c.h.b16 %v310
    %v969 = vunpack.c.l.b16 %v311
    %v970 = vunpack.c.h.b16 %v311
    %v971 = vunpack.c.l.b16 %v312
    %v972 = vunpack.c.h.b16 %v312
    %v973 = vunpack.c.l.b16 %v313
    %v974 = vunpack.c.h.b16 %v313
    %v975 = vunpack.c.l.b16 %v314
    %v976 = vunpack.c.h.b16 %v314
    %v977 = vunpack.c.l.b16 %v315
    %v978 = vunpack.c.h.b16 %v315
    %v979 = vunpack.c.l.b16 %v316
    %v980 = vunpack.c.h.b16 %v316
    %v981 = vunpack.c.l.b16 %v317
    %v982 = vunpack.c.h.b16 %v317
    %v983 = vunpack.c.l.b16 %v318
    %v984 = vunpack.c.h.b16 %v318
    %v985 = vunpack.c.l.b16 %v319
    %v986 = vunpack.c.h.b16 %v319
    %v987 = vunpack.c.l.b16 %v320
    %v988 = vunpack.c.h.b16 %v320
    %v989 = vunpack.c.l.b16 %v321
    %v990 = vunpack.c.h.b16 %v321
    %v991 = vunpack.c.l.b16 %v322
    %v992 = vunpack.c.h.b16 %v322
    %v993 = vunpack.c.l.b16 %v323
    %v994 = vunpack.c.h.b16 %v323
    %v995 = vunpack.c.l.b16 %v324
    %v996 = vunpack.c.h.b16 %v324
    %v997 = vunpack.c.l.b16 %v325
    %v998 = vunpack.c.h.b16 %v325
    %v999 = vunpack.c.l.b16 %v326
    %v1000 = vunpack.c.h.b16 %v326
    %v1001 = vunpack.c.l.b16 %v327
    %v1002 = vunpack.c.h.b16 %v327
    %v1003 = vunpack.c.l.b16 %v328
    %v1004 = vunpack.c.h.b16 %v328
    %v1005 = vunpack.c.l.b16 %v329
    %v1006 = vunpack.c.h.b16 %v329
    %v1007 = vunpack.c.l.b16 %v330
    %v1008 = vunpack.c.h.b16 %v330
    %v1009 = vunpack.c.l.b16 %v331
    %v1010 = vunpack.c.h.b16 %v331
    %v1011 = vunpack.c.l.b16 %v332
    %v1012 = vunpack.c.h.b16 %v332
    %v1013 = vunpack.c.l.b16 %v333
    %v1014 = vunpack.c.h.b16 %v333
    %v1015 = vunpack.c.l.b16 %v334
    %v1016 = vunpack.c.h.b16 %v334
    %v1017 = vunpack.c.l.b16 %v335
    %v1018 = vunpack.c.h.b16 %v335
    %v1019 = vunpack.c.l.b16 %v336
    %v1020 = vunpack.c.h.b16 %v336
    %v1021 = vunpack.c.l.b16 %v337
    %v1022 = vunpack.c.h.b16 %v337
    %v1023 = vunpack.c.l.b16 %v338
    %v1024 = vunpack.c.h.b16 %v338
    %v1025 = vunpack.c.l.b16 %v339
    %v1026 = vunpack.c.h.b16 %v339
    %v1027 = vunpack.c.l.b16 %v340
    %v1028 = vunpack.c.h.b16 %v340
    %v1029 = vunpack.c.l.b16 %v341
    %v1030 = vunpack.c.h.b16 %v341
    %v1031 = vunpack.c.l.b16 %v342
    %v1032 = vunpack.c.h.b16 %v342
    %v1033 = vunpack.c.l.b16 %v343
    %v1034 = vunpack.c.h.b16 %v343
    %v1035 = vunpack.c.l.b16 %v344
    %v1036 = vunpack.c.h.b16 %v344
    %v1037 = vunpack.c.l.b16 %v345
    %v1038 = vunpack.c.h.b16 %v345
    %v1039 = vunpack.c.l.b16 %v346
    %v1040 = vunpack.c.h.b16 %v346
    %v1041 = vunpack.c.l.b16 %v347
    %v1042 = vunpack.c.h.b16 %v347
    %v1043 = vunpack.c.l.b16 %v348
    %v1044 = vunpack.c.h.b16 %v348
    %v1045 = vunpack.c.l.b16 %v349
    %v1046 = vunpack.c.h.b16 %v349
    %v1047 = vunpack.c.l.b16 %v350
    %v1048 = vunpack.c.h.b16 %v350
    %v1049 = vunpack.c.l.b16 %v351
    %v1050 = vunpack.c.h.b16 %v351
    %v1051 = vunpack.c.l.b16 %v352
    %v1052 = vunpack.c.h.b16 %v352
    %v1053 = vunpack.c.l.b16 %v353
    %v1054 = vunpack.c.h.b16 %v353
    %v1055 = vunpack.c.l.b16 %v354
    %v1056 = vunpack.c.h.b16 %v354
    %v1057 = vunpack.c.l.b16 %v355
    %v1058 = vunpack.c.h.b16 %v355
    %v1059 = vunpack.c.l.b16 %v356
    %v1060 = vunpack.c.h.b16 %v356
    %v1061 = vunpack.c.l.b16 %v357
    %v1062 = vunpack.c.h.b16 %v357
    %v1063 = vunpack.c.l.b16 %v358
    %v1064 = vunpack.c.h.b16 %v358
    %v1065 = vunpack.c.l.b16 %v359
    %v1066 = vunpack.c.h.b16 %v359
    %v1067 = vunpack.c.l.b16 %v360
    %v1068 = vunpack.c.h.b16 %v360
    %v1069 = vunpack.c.l.b16 %v361
    %v1070 = vunpack.c.h.b16 %v361
    %v1071 = vunpack.c.l.b16 %v362
    %v1072 = vunpack.c.h.b16 %v362
    %v1073 = vunpack.c.l.b16 %v363
    %v1074 = vunpack.c.h.b16 %v363
    %v1075 = vunpack.c.l.b16 %v364
    %v1076 = vunpack.c.h.b16 %v364
    %v1077 = vunpack.c.l.b16 %v365
    %v1078 = vunpack.c.h.b16 %v365
    %v1079 = vunpack.c.l.b16 %v366
    %v1080 = vunpack.c.h.b16 %v366
    %v1081 = vunpack.c.l.b16 %v367
    %v1082 = vunpack.c.h.b16 %v367
    %v1083 = vunpack.c.l.b16 %v368
    %v1084 = vunpack.c.h.b16 %v368
    %v1085 = vunpack.c.l.b16 %v369
    %v1086 = vunpack.c.h.b16 %v369
    %v1087 = vunpack.c.l.b16 %v370
    %v1088 = vunpack.c.h.b16 %v370
    %v1089 = vunpack.c.l.b16 %v371
    %v1090 = vunpack.c.h.b16 %v371
    %v1091 = vunpack.c.l.b16 %v372
    %v1092 = vunpack.c.h.b16 %v372
    %v1093 = vunpack.c.l.b16 %v373
    %v1094 = vunpack.c.h.b16 %v373
    %v1095 = vunpack.c.l.b16 %v374
    %v1096 = vunpack.c.h.b16 %v374
    %v1097 = vunpack.c.l.b16 %v375
    %v1098 = vunpack.c.h.b16 %v375
    %v1099 = vunpack.c.l.b16 %v376
    %v1100 = vunpack.c.h.b16 %v376
    %v1101 = vunpack.c.l.b16 %v377
    %v1102 = vunpack.c.h.b16 %v377
    %v1103 = vunpack.c.l.b16 %v378
    %v1104 = vunpack.c.h.b16 %v378
    %v1105 = vunpack.c.l.b16 %v379
    %v1106 = vunpack.c.h.b16 %v379
    %v1107 = vunpack.c.l.b16 %v380
    %v1108 = vunpack.c.h.b16 %v380
    %v1109 = vunpack.c.l.b16 %v381
    %v1110 = vunpack.c.h.b16 %v381
    %v1111 = vunpack.c.l.b16 %v382
    %v1112 = vunpack.c.h.b16 %v382
    %v1113 = vunpack.c.l.b16 %v383
    %v1114 = vunpack.c.h.b16 %v383
    %v1115 = vunpack.c.l.b16 %v384
    %v1116 = vunpack.c.h.b16 %v384
    %v1117 = vunpack.c.l.b16 %v385
    %v1118 = vunpack.c.h.b16 %v385
    %v1119 = vunpack.c.l.b16 %v386
    %v1120 = vunpack.c.h.b16 %v386
    %v1121 = vunpack.c.l.b16 %v387
    %v1122 = vunpack.c.h.b16 %v387
    %v1123 = vunpack.c.l.b16 %v388
    %v1124 = vunpack.c.h.b16 %v388
    %v1125 = vunpack.c.l.b16 %v389
    %v1126 = vunpack.c.h.b16 %v389
    %v1127 = vunpack.c.l.b16 %v390
    %v1128 = vunpack.c.h.b16 %v390
    %v1129 = vunpack.c.l.b16 %v391
    %v1130 = vunpack.c.h.b16 %v391
    %v1131 = vunpack.c.l.b16 %v392
    %v1132 = vunpack.c.h.b16 %v392
    %v1133 = vunpack.c.l.b16 %v393
    %v1134 = vunpack.c.h.b16 %v393
    %v1135 = vunpack.c.l.b16 %v394
    %v1136 = vunpack.c.h.b16 %v394
    %v1137 = vunpack.c.l.b16 %v395
    %v1138 = vunpack.c.h.b16 %v395
    %v1139 = vunpack.c.l.b16 %v396
    %v1140 = vunpack.c.h.b16 %v396
    %v1141 = vunpack.c.l.b16 %v397
    %v1142 = vunpack.c.h.b16 %v397
    %v1143 = vunpack.c.l.b16 %v398
    %v1144 = vunpack.c.h.b16 %v398
    %v1145 = vunpack.c.l.b16 %v399
    %v1146 = vunpack.c.h.b16 %v399
    %v1147 = vunpack.c.l.b16 %v400
    %v1148 = vunpack.c.h.b16 %v400
    %v1149 = vunpack.c.l.b16 %v401
    %v1150 = vunpack.c.h.b16 %v401
    %v1151 = vunpack.c.l.b16 %v402
    %v1152 = vunpack.c.h.b16 %v402
    %v1153 = vunpack.c.l.b16 %v403
    %v1154 = vunpack.c.h.b16 %v403
    %v1155 = vunpack.c.l.b16 %v404
    %v1156 = vunpack.c.h.b16 %v404
    %v1157 = vunpack.c.l.b16 %v405
    %v1158 = vunpack.c.h.b16 %v405
    %v1159 = vunpack.c.l.b16 %v406
    %v1160 = vunpack.c.h.b16 %v406
    %v1161 = vunpack.c.l.b16 %v407
    %v1162 = vunpack.c.h.b16 %v407
    %v1163 = vunpack.c.l.b16 %v408
    %v1164 = vunpack.c.h.b16 %v408
    %v1165 = vunpack.c.l.b16 %v409
    %v1166 = vunpack.c.h.b16 %v409
    %v1167 = vunpack.c.l.b16 %v410
    %v1168 = vunpack.c.h.b16 %v410
    %v1169 = vunpack.c.l.b16 %v411
    %v1170 = vunpack.c.h.b16 %v411
    %v1171 = vunpack.c.l.b16 %v412
    %v1172 = vunpack.c.h.b16 %v412
    %v1173 = vunpack.c.l.b16 %v413
    %v1174 = vunpack.c.h.b16 %v413
    %v1175 = vunpack.c.l.b16 %v414
    %v1176 = vunpack.c.h.b16 %v414
    %v1177 = vunpack.c.l.b16 %v415
    %v1178 = vunpack.c.h.b16 %v415
    %v1179 = vunpack.c.l.b16 %v416
    %v1180 = vunpack.c.h.b16 %v416
    %v1181 = vunpack.c.l.b16 %v417
    %v1182 = vunpack.c.h.b16 %v417
    %v1183 = vunpack.c.l.b16 %v418
    %v1184 = vunpack.c.h.b16 %v418
    %v1185 = vunpack.c.l.b16 %v419
    %v1186 = vunpack.c.h.b16 %v419
    %v1187 = vunpack.c.l.b16 %v420
    %v1188 = vunpack.c.h.b16 %v420
    %v1189 = vunpack.c.l.b16 %v421
    %v1190 = vunpack.c.h.b16 %v421
    %v1191 = vunpack.c.l.b16 %v422
    %v1192 = vunpack.c.h.b16 %v422
    %v1193 = vunpack.c.l.b16 %v423
    %v1194 = vunpack.c.h.b16 %v423
    %v1195 = vunpack.c.l.b16 %v424
    %v1196 = vunpack.c.h.b16 %v424
    %v1197 = vunpack.c.l.b16 %v425
    %v1198 = vunpack.c.h.b16 %v425
    %v1199 = vunpack.c.l.b16 %v426
    %v1200 = vunpack.c.h.b16 %v426
    %v1201 = vunpack.c.l.b16 %v427
    %v1202 = vunpack.c.h.b16 %v427
    %v1203 = vunpack.c.l.b16 %v428
    %v1204 = vunpack.c.h.b16 %v428
    %v1205 = vunpack.c.l.b16 %v429
    %v1206 = vunpack.c.h.b16 %v429
    %v1207 = vunpack.c.l.b16 %v430
    %v1208 = vunpack.c.h.b16 %v430
    %v1209 = vunpack.c.l.b16 %v431
    %v1210 = vunpack.c.h.b16 %v431
    %v1211 = vunpack.c.l.b16 %v432
    %v1212 = vunpack.c.h.b16 %v432
    %v1213 = vunpack.c.l.b16 %v433
    %v1214 = vunpack.c.h.b16 %v433
    %v1215 = vunpack.c.l.b16 %v434
    %v1216 = vunpack.c.h.b16 %v434
    %v1217 = vunpack.c.l.b16 %v435
    %v1218 = vunpack.c.h.b16 %v435
    %v1219 = vunpack.c.l.b16 %v436
    %v1220 = vunpack.c.h.b16 %v436
    %v1221 = vpack.c.b16 %v709, %v705
    %v1222 = vpack.c.b16 %v710, %v706
    %v1223 = vpack.c.b16 %v711, %v707
    %v1224 = vpack.c.b16 %v712, %v708
    %v1225 = vpack.c.b16 %v717, %v713
    %v1226 = vpack.c.b16 %v718, %v714
    %v1227 = vpack.c.b16 %v719, %v715
    %v1228 = vpack.c.b16 %v720, %v716
    %v1229 = vpack.c.b16 %v725, %v721
    %v1230 = vpack.c.b16 %v726, %v722
    %v1231 = vpack.c.b16 %v727, %v723
    %v1232 = vpack.c.b16 %v728, %v724
    %v1233 = vpack.c.b16 %v733, %v729
    %v1234 = vpack.c.b16 %v734, %v730
    %v1235 = vpack.c.b16 %v735, %v731
    %v1236 = vpack.c.b16 %v736, %v732
    %v1237 = vpack.c.b16 %v741, %v737
    %v1238 = vpack.c.b16 %v742, %v738
    %v1239 = vpack.c.b16 %v743, %v739
    %v1240 = vpack.c.b16 %v744, %v740
    %v1241 = vpack.c.b16 %v749, %v745
    %v1242 = vpack.c.b16 %v750, %v746
    %v1243 = vpack.c.b16 %v751, %v747
    %v1244 = vpack.c.b16 %v752, %v748
    %v1245 = vpack.c.b16 %v757, %v753
    %v1246 = vpack.c.b16 %v758, %v754
    %v1247 = vpack.c.b16 %v759, %v755
    %v1248 = vpack.c.b16 %v760, %v756
    %v1249 = vpack.c.b16 %v765, %v761
    %v1250 = vpack.c.b16 %v766, %v762
    %v1251 = vpack.c.b16 %v767, %v763
    %v1252 = vpack.c.b16 %v768, %v764
    %v1253 = vpack.c.b16 %v773, %v769
    %v1254 = vpack.c.b16 %v774, %v770
    %v1255 = vpack.c.b16 %v775, %v771
    %v1256 = vpack.c.b16 %v776, %v772
    %v1257 = vpack.c.b16 %v781, %v777
    %v1258 = vpack.c.b16 %v782, %v778
    %v1259 = vpack.c.b16 %v783, %v779
    %v1260 = vpack.c.b16 %v784, %v780
    %v1261 = vpack.c.b16 %v789, %v785
    %v1262 = vpack.c.b16 %v790, %v786
    %v1263 = vpack.c.b16 %v791, %v787
    %v1264 = vpack.c.b16 %v792, %v788
    %v1265 = vpack.c.b16 %v797, %v793
    %v1266 = vpack.c.b16 %v798, %v794
    %v1267 = vpack.c.b16 %v799, %v795
    %v1268 = vpack.c.b16 %v800, %v796
    %v1269 = vpack.c.b16 %v805, %v801
    %v1270 = vpack.c.b16 %v806, %v802
    %v1271 = vpack.c.b16 %v807, %v803
    %v1272 = vpack.c.b16 %v808, %v804
    %v1273 = vpack.c.b16 %v813, %v809
    %v1274 = vpack.c.b16 %v814, %v810
    %v1275 = vpack.c.b16 %v815, %v811
    %v1276 = vpack.c.b16 %v816, %v812
    %v1277 = vpack.c.b16 %v821, %v817
    %v1278 = vpack.c.b16 %v822, %v818
    %v1279 = vpack.c.b16 %v823, %v819
    %v1280 = vpack.c.b16 %v824, %v820
    %v1281 = vpack.c.b16 %v829, %v825
    %v1282 = vpack.c.b16 %v830, %v826
    %v1283 = vpack.c.b16 %v831, %v827
    %v1284 = vpack.c.b16 %v832, %v828
    %v1285 = vpack.c.b16 %v837, %v833
    %v1286 = vpack.c.b16 %v838, %v834
    %v1287 = vpack.c.b16 %v839, %v835
    %v1288 = vpack.c.b16 %v840, %v836
    %v1289 = vpack.c.b16 %v845, %v841
    %v1290 = vpack.c.b16 %v846, %v842
    %v1291 = vpack.c.b16 %v847, %v843
    %v1292 = vpack.c.b16 %v848, %v844
    %v1293 = vpack.c.b16 %v853, %v849
    %v1294 = vpack.c.b16 %v854, %v850
    %v1295 = vpack.c.b16 %v855, %v851
    %v1296 = vpack.c.b16 %v856, %v852
    %v1297 = vpack.c.b16 %v861, %v857
    %v1298 = vpack.c.b16 %v862, %v858
    %v1299 = vpack.c.b16 %v863, %v859
    %v1300 = vpack.c.b16 %v864, %v860
    %v1301 = vpack.c.b16 %v869, %v865
    %v1302 = vpack.c.b16 %v870, %v866
    %v1303 = vpack.c.b16 %v871, %v867
    %v1304 = vpack.c.b16 %v872, %v868
    %v1305 = vpack.c.b16 %v877, %v873
    %v1306 = vpack.c.b16 %v878, %v874
    %v1307 = vpack.c.b16 %v879, %v875
    %v1308 = vpack.c.b16 %v880, %v876
    %v1309 = vpack.c.b16 %v885, %v881
    %v1310 = vpack.c.b16 %v886, %v882
    %v1311 = vpack.c.b16 %v887, %v883
    %v1312 = vpack.c.b16 %v888, %v884
    %v1313 = vpack.c.b16 %v893, %v889
    %v1314 = vpack.c.b16 %v894, %v890
    %v1315 = vpack.c.b16 %v895, %v891
    %v1316 = vpack.c.b16 %v896, %v892
    %v1317 = vpack.c.b16 %v901, %v897
    %v1318 = vpack.c.b16 %v902, %v898
    %v1319 = vpack.c.b16 %v903, %v899
    %v1320 = vpack.c.b16 %v904, %v900
    %v1321 = vpack.c.b16 %v909, %v905
    %v1322 = vpack.c.b16 %v910, %v906
    %v1323 = vpack.c.b16 %v911, %v907
    %v1324 = vpack.c.b16 %v912, %v908
    %v1325 = vpack.c.b16 %v917, %v913
    %v1326 = vpack.c.b16 %v918, %v914
    %v1327 = vpack.c.b16 %v919, %v915
    %v1328 = vpack.c.b16 %v920, %v916
    %v1329 = vpack.c.b16 %v925, %v921
    %v1330 = vpack.c.b16 %v926, %v922
    %v1331 = vpack.c.b16 %v927, %v923
    %v1332 = vpack.c.b16 %v928, %v924
    %v1333 = vpack.c.b16 %v933, %v929
    %v1334 = vpack.c.b16 %v934, %v930
    %v1335 = vpack.c.b16 %v935, %v931
    %v1336 = vpack.c.b16 %v936, %v932
    %v1337 = vpack.c.b16 %v941, %v937
    %v1338 = vpack.c.b16 %v942, %v938
    %v1339 = vpack.c.b16 %v943, %v939
    %v1340 = vpack.c.b16 %v944, %v940
    %v1341 = vpack.c.b16 %v949, %v945
    %v1342 = vpack.c.b16 %v950, %v946
    %v1343 = vpack.c.b16 %v951, %v947
    %v1344 = vpack.c.b16 %v952, %v948
    %v1345 = vpack.c.b16 %v957, %v953
    %v1346 = vpack.c.b16 %v958, %v954
    %v1347 = vpack.c.b16 %v959, %v955
    %v1348 = vpack.c.b16 %v960, %v956
    %v1349 = vpack.c.b16 %v965, %v961
    %v1350 = vpack.c.b16 %v966, %v962
    %v1351 = vpack.c.b16 %v967, %v963
    %v1352 = vpack.c.b16 %v968, %v964
    %v1353 = vpack.c.b16 %v973, %v969
    %v1354 = vpack.c.b16 %v974, %v970
    %v1355 = vpack.c.b16 %v975, %v971
    %v1356 = vpack.c.b16 %v976, %v972
    %v1357 = vpack.c.b16 %v981, %v977
    %v1358 = vpack.c.b16 %v982, %v978
    %v1359 = vpack.c.b16 %v983, %v979
    %v1360 = vpack.c.b16 %v984, %v980
    %v1361 = vpack.c.b16 %v989, %v985
    %v1362 = vpack.c.b16 %v990, %v986
    %v1363 = vpack.c.b16 %v991, %v987
    %v1364 = vpack.c.b16 %v992, %v988
    %v1365 = vpack.c.b16 %v997, %v993
    %v1366 = vpack.c.b16 %v998, %v994
    %v1367 = vpack.c.b16 %v999, %v995
    %v1368 = vpack.c.b16 %v1000, %v996
    %v1369 = vpack.c.b16 %v1005, %v1001
    %v1370 = vpack.c.b16 %v1006, %v1002
    %v1371 = vpack.c.b16 %v1007, %v1003
    %v1372 = vpack.c.b16 %v1008, %v1004
    %v1373 = vpack.c.b16 %v1013, %v1009
    %v1374 = vpack.c.b16 %v1014, %v1010
    %v1375 = vpack.c.b16 %v1015, %v1011
    %v1376 = vpack.c.b16 %v1016, %v1012
    %v1377 = vpack.c.b16 %v1021, %v1017
    %v1378 = vpack.c.b16 %v1022, %v1018
    %v1379 = vpack.c.b16 %v1023, %v1019
    %v1380 = vpack.c.b16 %v1024, %v1020
    %v1381 = vpack.c.b16 %v1029, %v1025
    %v1382 = vpack.c.b16 %v1030, %v1026
    %v1383 = vpack.c.b16 %v1031, %v1027
    %v1384 = vpack.c.b16 %v1032, %v1028
    %v1385 = vpack.c.b16 %v1037, %v1033
    %v1386 = vpack.c.b16 %v1038, %v1034
    %v1387 = vpack.c.b16 %v1039, %v1035
    %v1388 = vpack.c.b16 %v1040, %v1036
    %v1389 = vpack.c.b16 %v1045, %v1041
    %v1390 = vpack.c.b16 %v1046, %v1042
    %v1391 = vpack.c.b16 %v1047, %v1043
    %v1392 = vpack.c.b16 %v1048, %v1044
    %v1393 = vpack.c.b16 %v1053, %v1049
    %v1394 = vpack.c.b16 %v1054, %v1050
    %v1395 = vpack.c.b16 %v1055, %v1051
    %v1396 = vpack.c.b16 %v1056, %v1052
    %v1397 = vpack.c.b16 %v1061, %v1057
    %v1398 = vpack.c.b16 %v1062, %v1058
    %v1399 = vpack.c.b16 %v1063, %v1059
    %v1400 = vpack.c.b16 %v1064, %v1060
    %v1401 = vpack.c.b16 %v1069, %v1065
    %v1402 = vpack.c.b16 %v1070, %v1066
    %v1403 = vpack.c.b16 %v1071, %v1067
    %v1404 = vpack.c.b16 %v1072, %v1068
    %v1405 = vpack.c.b16 %v1077, %v1073
    %v1406 = vpack.c.b16 %v1078, %v1074
    %v1407 = vpack.c.b16 %v1079, %v1075
    %v1408 = vpack.c.b16 %v1080, %v1076
    %v1409 = vpack.c.b16 %v1085, %v1081
    %v1410 = vpack.c.b16 %v1086, %v1082
    %v1411 = vpack.c.b16 %v1087, %v1083
    %v1412 = vpack.c.b16 %v1088, %v1084
    %v1413 = vpack.c.b16 %v1093, %v1089
    %v1414 = vpack.c.b16 %v1094, %v1090
    %v1415 = vpack.c.b16 %v1095, %v1091
    %v1416 = vpack.c.b16 %v1096, %v1092
    %v1417 = vpack.c.b16 %v1101, %v1097
    %v1418 = vpack.c.b16 %v1102, %v1098
    %v1419 = vpack.c.b16 %v1103, %v1099
    %v1420 = vpack.c.b16 %v1104, %v1100
    %v1421 = vpack.c.b16 %v1109, %v1105
    %v1422 = vpack.c.b16 %v1110, %v1106
    %v1423 = vpack.c.b16 %v1111, %v1107
    %v1424 = vpack.c.b16 %v1112, %v1108
    %v1425 = vpack.c.b16 %v1117, %v1113
    %v1426 = vpack.c.b16 %v1118, %v1114
    %v1427 = vpack.c.b16 %v1119, %v1115
    %v1428 = vpack.c.b16 %v1120, %v1116
    %v1429 = vpack.c.b16 %v1125, %v1121
    %v1430 = vpack.c.b16 %v1126, %v1122
    %v1431 = vpack.c.b16 %v1127, %v1123
    %v1432 = vpack.c.b16 %v1128, %v1124
    %v1433 = vpack.c.b16 %v1133, %v1129
    %v1434 = vpack.c.b16 %v1134, %v1130
    %v1435 = vpack.c.b16 %v1135, %v1131
    %v1436 = vpack.c.b16 %v1136, %v1132
    %v1437 = vpack.c.b16 %v1141, %v1137
    %v1438 = vpack.c.b16 %v1142, %v1138
    %v1439 = vpack.c.b16 %v1143, %v1139
    %v1440 = vpack.c.b16 %v1144, %v1140
    %v1441 = vpack.c.b16 %v1149, %v1145
    %v1442 = vpack.c.b16 %v1150, %v1146
    %v1443 = vpack.c.b16 %v1151, %v1147
    %v1444 = vpack.c.b16 %v1152, %v1148
    %v1445 = vpack.c.b16 %v1157, %v1153
    %v1446 = vpack.c.b16 %v1158, %v1154
    %v1447 = vpack.c.b16 %v1159, %v1155
    %v1448 = vpack.c.b16 %v1160, %v1156
    %v1449 = vpack.c.b16 %v1165, %v1161
    %v1450 = vpack.c.b16 %v1166, %v1162
    %v1451 = vpack.c.b16 %v1167, %v1163
    %v1452 = vpack.c.b16 %v1168, %v1164
    %v1453 = vpack.c.b16 %v1173, %v1169
    %v1454 = vpack.c.b16 %v1174, %v1170
    %v1455 = vpack.c.b16 %v1175, %v1171
    %v1456 = vpack.c.b16 %v1176, %v1172
    %v1457 = vpack.c.b16 %v1181, %v1177
    %v1458 = vpack.c.b16 %v1182, %v1178
    %v1459 = vpack.c.b16 %v1183, %v1179
    %v1460 = vpack.c.b16 %v1184, %v1180
    %v1461 = vpack.c.b16 %v1189, %v1185
    %v1462 = vpack.c.b16 %v1190, %v1186
    %v1463 = vpack.c.b16 %v1191, %v1187
    %v1464 = vpack.c.b16 %v1192, %v1188
    %v1465 = vpack.c.b16 %v1197, %v1193
    %v1466 = vpack.c.b16 %v1198, %v1194
    %v1467 = vpack.c.b16 %v1199, %v1195
    %v1468 = vpack.c.b16 %v1200, %v1196
    %v1469 = vpack.c.b16 %v1205, %v1201
    %v1470 = vpack.c.b16 %v1206, %v1202
    %v1471 = vpack.c.b16 %v1207, %v1203
    %v1472 = vpack.c.b16 %v1208, %v1204
    %v1473 = vpack.c.b16 %v1213, %v1209
    %v1474 = vpack.c.b16 %v1214, %v1210
    %v1475 = vpack.c.b16 %v1215, %v1211
    %v1476 = vpack.c.b16 %v1216, %v1212
    %v1477 = vpack.c.b16 %v1217, %v1217
    %v1478 = vpack.c.b16 %v1218, %v1218
    %v1479 = vpack.c.b16 %v1219, %v1219
    %v1480 = vpack.c.b16 %v1220, %v1220
    %vm1737 = vcmask 48128
    %v1739 = vsel %vm1737, %v178, 0
    %vm1741 = vcmask 1042432
    %v1743 = vsel %vm1741, %v1477, 0
    %v1746 = vsel %vm1741, %v1478, 0
    %v1749 = vsel %vm1741, %v1479, 0
    %v1752 = vsel %vm1741, %v1480, 0
    %1754 = vmatpush.bf16.msra.mxu0 %v1249
    %1755 = vmatpush.bf16.msra.mxu0 %v1245
    %1756 = vmatpush.bf16.msra.mxu0 %v1241
    %1757 = vmatpush.bf16.msra.mxu0 %v1237
    %1758 = vmatpush.bf16.msra.mxu0 %v1233
    %1759 = vmatpush.bf16.msra.mxu0 %v1229
    %1760 = vmatpush.bf16.msra.mxu0 %v1225
    %1761 = vmatpush.bf16.msra.mxu0 %v1221
    %1762 = vmatmul.bf16.gmra.mxu0 %v170
    %v1763 = vpop.f32.mrf.mxu0
    %v1764 = vadd.f32 %v439, %v1763
    %v1765 = vpop.f32.mrf.mxu0
    %1766 = vdwg.mxu0
    %1767 = vmatpush.bf16.msra.mxu0 %v1281
    %1768 = vmatpush.bf16.msra.mxu0 %v1277
    %1769 = vmatpush.bf16.msra.mxu0 %v1273
    %1770 = vmatpush.bf16.msra.mxu0 %v1269
    %1771 = vmatpush.bf16.msra.mxu0 %v1265
    %1772 = vmatpush.bf16.msra.mxu0 %v1261
    %1773 = vmatpush.bf16.msra.mxu0 %v1257
    %1774 = vmatpush.bf16.msra.mxu0 %v1253
    %1775 = vmatmul.bf16.gmra.mxu0 %v171
    %v1776 = vpop.f32.mrf.mxu0
    %v1777 = vadd.f32 %v1764, %v1776
    %v1778 = vpop.f32.mrf.mxu0
    %1779 = vdwg.mxu0
    %1780 = vmatpush.bf16.msra.mxu0 %v1313
    %1781 = vmatpush.bf16.msra.mxu0 %v1309
    %1782 = vmatpush.bf16.msra.mxu0 %v1305
    %1783 = vmatpush.bf16.msra.mxu0 %v1301
    %1784 = vmatpush.bf16.msra.mxu0 %v1297
    %1785 = vmatpush.bf16.msra.mxu0 %v1293
    %1786 = vmatpush.bf16.msra.mxu0 %v1289
    %1787 = vmatpush.bf16.msra.mxu0 %v1285
    %1788 = vmatmul.bf16.gmra.mxu0 %v172
    %v1789 = vpop.f32.mrf.mxu0
    %v1790 = vadd.f32 %v1777, %v1789
    %v1791 = vpop.f32.mrf.mxu0
    %1792 = vdwg.mxu0
    %1793 = vmatpush.bf16.msra.mxu0 %v1345
    %1794 = vmatpush.bf16.msra.mxu0 %v1341
    %1795 = vmatpush.bf16.msra.mxu0 %v1337
    %1796 = vmatpush.bf16.msra.mxu0 %v1333
    %1797 = vmatpush.bf16.msra.mxu0 %v1329
    %1798 = vmatpush.bf16.msra.mxu0 %v1325
    %1799 = vmatpush.bf16.msra.mxu0 %v1321
    %1800 = vmatpush.bf16.msra.mxu0 %v1317
    %1801 = vmatmul.bf16.gmra.mxu0 %v173
    %v1802 = vpop.f32.mrf.mxu0
    %v1803 = vadd.f32 %v1790, %v1802
    %v1804 = vpop.f32.mrf.mxu0
    %1805 = vdwg.mxu0
    %1806 = vmatpush.bf16.msra.mxu0 %v1377
    %1807 = vmatpush.bf16.msra.mxu0 %v1373
    %1808 = vmatpush.bf16.msra.mxu0 %v1369
    %1809 = vmatpush.bf16.msra.mxu0 %v1365
    %1810 = vmatpush.bf16.msra.mxu0 %v1361
    %1811 = vmatpush.bf16.msra.mxu0 %v1357
    %1812 = vmatpush.bf16.msra.mxu0 %v1353
    %1813 = vmatpush.bf16.msra.mxu0 %v1349
    %1814 = vmatmul.bf16.gmra.mxu0 %v174
    %v1815 = vpop.f32.mrf.mxu0
    %v1816 = vadd.f32 %v1803, %v1815
    %v1817 = vpop.f32.mrf.mxu0
    %1818 = vdwg.mxu0
    %1819 = vmatpush.bf16.msra.mxu0 %v1409
    %1820 = vmatpush.bf16.msra.mxu0 %v1405
    %1821 = vmatpush.bf16.msra.mxu0 %v1401
    %1822 = vmatpush.bf16.msra.mxu0 %v1397
    %1823 = vmatpush.bf16.msra.mxu0 %v1393
    %1824 = vmatpush.bf16.msra.mxu0 %v1389
    %1825 = vmatpush.bf16.msra.mxu0 %v1385
    %1826 = vmatpush.bf16.msra.mxu0 %v1381
    %1827 = vmatmul.bf16.gmra.mxu0 %v175
    %v1828 = vpop.f32.mrf.mxu0
    %v1829 = vadd.f32 %v1816, %v1828
    %v1830 = vpop.f32.mrf.mxu0
    %1831 = vdwg.mxu0
    %1832 = vmatpush.bf16.msra.mxu0 %v1441
    %1833 = vmatpush.bf16.msra.mxu0 %v1437
    %1834 = vmatpush.bf16.msra.mxu0 %v1433
    %1835 = vmatpush.bf16.msra.mxu0 %v1429
    %1836 = vmatpush.bf16.msra.mxu0 %v1425
    %1837 = vmatpush.bf16.msra.mxu0 %v1421
    %1838 = vmatpush.bf16.msra.mxu0 %v1417
    %1839 = vmatpush.bf16.msra.mxu0 %v1413
    %1840 = vmatmul.bf16.gmra.mxu0 %v176
    %v1841 = vpop.f32.mrf.mxu0
    %v1842 = vadd.f32 %v1829, %v1841
    %v1843 = vpop.f32.mrf.mxu0
    %1844 = vdwg.mxu0
    %1845 = vmatpush.bf16.msra.mxu0 %v1473
    %1846 = vmatpush.bf16.msra.mxu0 %v1469
    %1847 = vmatpush.bf16.msra.mxu0 %v1465
    %1848 = vmatpush.bf16.msra.mxu0 %v1461
    %1849 = vmatpush.bf16.msra.mxu0 %v1457
    %1850 = vmatpush.bf16.msra.mxu0 %v1453
    %1851 = vmatpush.bf16.msra.mxu0 %v1449
    %1852 = vmatpush.bf16.msra.mxu0 %v1445
    %1853 = vmatmul.bf16.gmra.mxu0 %v177
    %v1854 = vpop.f32.mrf.mxu0
    %v1855 = vadd.f32 %v1842, %v1854
    %v1856 = vpop.f32.mrf.mxu0
    %1857 = vdwg.mxu0
    %1858 = vmatpush.bf16.msra.mxu0 0
    %1859 = vmatpush.bf16.msra.mxu0 0
    %1860 = vmatpush.bf16.msra.mxu0 0
    %1861 = vmatpush.bf16.msra.mxu0 0
    %1862 = vmatpush.bf16.msra.mxu0 0
    %1863 = vmatpush.bf16.msra.mxu0 0
    %1864 = vmatpush.bf16.msra.mxu0 0
    %1865 = vmatpush.bf16.msra.mxu0 %v1743
    %1866 = vmatmul.bf16.gmra.mxu0 %v1739
    %v1867 = vpop.f32.mrf.mxu0
    %v1868 = vadd.f32 %v1855, %v1867
    %v1869 = vpop.f32.mrf.mxu0
    %1870 = vdwg.mxu0
    %1871 = vmatpush.bf16.msra.mxu0 %v1250
    %1872 = vmatpush.bf16.msra.mxu0 %v1246
    %1873 = vmatpush.bf16.msra.mxu0 %v1242
    %1874 = vmatpush.bf16.msra.mxu0 %v1238
    %1875 = vmatpush.bf16.msra.mxu0 %v1234
    %1876 = vmatpush.bf16.msra.mxu0 %v1230
    %1877 = vmatpush.bf16.msra.mxu0 %v1226
    %1878 = vmatpush.bf16.msra.mxu0 %v1222
    %1879 = vmatmul.bf16.gmra.mxu0 %v170
    %v1880 = vpop.f32.mrf.mxu0
    %v1881 = vadd.f32 %v440, %v1880
    %v1882 = vpop.f32.mrf.mxu0
    %1883 = vdwg.mxu0
    %1884 = vmatpush.bf16.msra.mxu0 %v1282
    %1885 = vmatpush.bf16.msra.mxu0 %v1278
    %1886 = vmatpush.bf16.msra.mxu0 %v1274
    %1887 = vmatpush.bf16.msra.mxu0 %v1270
    %1888 = vmatpush.bf16.msra.mxu0 %v1266
    %1889 = vmatpush.bf16.msra.mxu0 %v1262
    %1890 = vmatpush.bf16.msra.mxu0 %v1258
    %1891 = vmatpush.bf16.msra.mxu0 %v1254
    %1892 = vmatmul.bf16.gmra.mxu0 %v171
    %v1893 = vpop.f32.mrf.mxu0
    %v1894 = vadd.f32 %v1881, %v1893
    %v1895 = vpop.f32.mrf.mxu0
    %1896 = vdwg.mxu0
    %1897 = vmatpush.bf16.msra.mxu0 %v1314
    %1898 = vmatpush.bf16.msra.mxu0 %v1310
    %1899 = vmatpush.bf16.msra.mxu0 %v1306
    %1900 = vmatpush.bf16.msra.mxu0 %v1302
    %1901 = vmatpush.bf16.msra.mxu0 %v1298
    %1902 = vmatpush.bf16.msra.mxu0 %v1294
    %1903 = vmatpush.bf16.msra.mxu0 %v1290
    %1904 = vmatpush.bf16.msra.mxu0 %v1286
    %1905 = vmatmul.bf16.gmra.mxu0 %v172
    %v1906 = vpop.f32.mrf.mxu0
    %v1907 = vadd.f32 %v1894, %v1906
    %v1908 = vpop.f32.mrf.mxu0
    %1909 = vdwg.mxu0
    %1910 = vmatpush.bf16.msra.mxu0 %v1346
    %1911 = vmatpush.bf16.msra.mxu0 %v1342
    %1912 = vmatpush.bf16.msra.mxu0 %v1338
    %1913 = vmatpush.bf16.msra.mxu0 %v1334
    %1914 = vmatpush.bf16.msra.mxu0 %v1330
    %1915 = vmatpush.bf16.msra.mxu0 %v1326
    %1916 = vmatpush.bf16.msra.mxu0 %v1322
    %1917 = vmatpush.bf16.msra.mxu0 %v1318
    %1918 = vmatmul.bf16.gmra.mxu0 %v173
    %v1919 = vpop.f32.mrf.mxu0
    %v1920 = vadd.f32 %v1907, %v1919
    %v1921 = vpop.f32.mrf.mxu0
    %1922 = vdwg.mxu0
    %1923 = vmatpush.bf16.msra.mxu0 %v1378
    %1924 = vmatpush.bf16.msra.mxu0 %v1374
    %1925 = vmatpush.bf16.msra.mxu0 %v1370
    %1926 = vmatpush.bf16.msra.mxu0 %v1366
    %1927 = vmatpush.bf16.msra.mxu0 %v1362
    %1928 = vmatpush.bf16.msra.mxu0 %v1358
    %1929 = vmatpush.bf16.msra.mxu0 %v1354
    %1930 = vmatpush.bf16.msra.mxu0 %v1350
    %1931 = vmatmul.bf16.gmra.mxu0 %v174
    %v1932 = vpop.f32.mrf.mxu0
    %v1933 = vadd.f32 %v1920, %v1932
    %v1934 = vpop.f32.mrf.mxu0
    %1935 = vdwg.mxu0
    %1936 = vmatpush.bf16.msra.mxu0 %v1410
    %1937 = vmatpush.bf16.msra.mxu0 %v1406
    %1938 = vmatpush.bf16.msra.mxu0 %v1402
    %1939 = vmatpush.bf16.msra.mxu0 %v1398
    %1940 = vmatpush.bf16.msra.mxu0 %v1394
    %1941 = vmatpush.bf16.msra.mxu0 %v1390
    %1942 = vmatpush.bf16.msra.mxu0 %v1386
    %1943 = vmatpush.bf16.msra.mxu0 %v1382
    %1944 = vmatmul.bf16.gmra.mxu0 %v175
    %v1945 = vpop.f32.mrf.mxu0
    %v1946 = vadd.f32 %v1933, %v1945
    %v1947 = vpop.f32.mrf.mxu0
    %1948 = vdwg.mxu0
    %1949 = vmatpush.bf16.msra.mxu0 %v1442
    %1950 = vmatpush.bf16.msra.mxu0 %v1438
    %1951 = vmatpush.bf16.msra.mxu0 %v1434
    %1952 = vmatpush.bf16.msra.mxu0 %v1430
    %1953 = vmatpush.bf16.msra.mxu0 %v1426
    %1954 = vmatpush.bf16.msra.mxu0 %v1422
    %1955 = vmatpush.bf16.msra.mxu0 %v1418
    %1956 = vmatpush.bf16.msra.mxu0 %v1414
    %1957 = vmatmul.bf16.gmra.mxu0 %v176
    %v1958 = vpop.f32.mrf.mxu0
    %v1959 = vadd.f32 %v1946, %v1958
    %v1960 = vpop.f32.mrf.mxu0
    %1961 = vdwg.mxu0
    %1962 = vmatpush.bf16.msra.mxu0 %v1474
    %1963 = vmatpush.bf16.msra.mxu0 %v1470
    %1964 = vmatpush.bf16.msra.mxu0 %v1466
    %1965 = vmatpush.bf16.msra.mxu0 %v1462
    %1966 = vmatpush.bf16.msra.mxu0 %v1458
    %1967 = vmatpush.bf16.msra.mxu0 %v1454
    %1968 = vmatpush.bf16.msra.mxu0 %v1450
    %1969 = vmatpush.bf16.msra.mxu0 %v1446
    %1970 = vmatmul.bf16.gmra.mxu0 %v177
    %v1971 = vpop.f32.mrf.mxu0
    %v1972 = vadd.f32 %v1959, %v1971
    %v1973 = vpop.f32.mrf.mxu0
    %1974 = vdwg.mxu0
    %1975 = vmatpush.bf16.msra.mxu0 0
    %1976 = vmatpush.bf16.msra.mxu0 0
    %1977 = vmatpush.bf16.msra.mxu0 0
    %1978 = vmatpush.bf16.msra.mxu0 0
    %1979 = vmatpush.bf16.msra.mxu0 0
    %1980 = vmatpush.bf16.msra.mxu0 0
    %1981 = vmatpush.bf16.msra.mxu0 0
    %1982 = vmatpush.bf16.msra.mxu0 %v1746
    %1983 = vmatmul.bf16.gmra.mxu0 %v1739
    %v1984 = vpop.f32.mrf.mxu0
    %v1985 = vadd.f32 %v1972, %v1984
    %v1986 = vpop.f32.mrf.mxu0
    %1987 = vdwg.mxu0
    %1988 = vmatpush.bf16.msra.mxu0 %v1251
    %1989 = vmatpush.bf16.msra.mxu0 %v1247
    %1990 = vmatpush.bf16.msra.mxu0 %v1243
    %1991 = vmatpush.bf16.msra.mxu0 %v1239
    %1992 = vmatpush.bf16.msra.mxu0 %v1235
    %1993 = vmatpush.bf16.msra.mxu0 %v1231
    %1994 = vmatpush.bf16.msra.mxu0 %v1227
    %1995 = vmatpush.bf16.msra.mxu0 %v1223
    %1996 = vmatmul.bf16.gmra.mxu0 %v170
    %v1997 = vpop.f32.mrf.mxu0
    %v1998 = vadd.f32 %v441, %v1997
    %v1999 = vpop.f32.mrf.mxu0
    %2000 = vdwg.mxu0
    %2001 = vmatpush.bf16.msra.mxu0 %v1283
    %2002 = vmatpush.bf16.msra.mxu0 %v1279
    %2003 = vmatpush.bf16.msra.mxu0 %v1275
    %2004 = vmatpush.bf16.msra.mxu0 %v1271
    %2005 = vmatpush.bf16.msra.mxu0 %v1267
    %2006 = vmatpush.bf16.msra.mxu0 %v1263
    %2007 = vmatpush.bf16.msra.mxu0 %v1259
    %2008 = vmatpush.bf16.msra.mxu0 %v1255
    %2009 = vmatmul.bf16.gmra.mxu0 %v171
    %v2010 = vpop.f32.mrf.mxu0
    %v2011 = vadd.f32 %v1998, %v2010
    %v2012 = vpop.f32.mrf.mxu0
    %2013 = vdwg.mxu0
    %2014 = vmatpush.bf16.msra.mxu0 %v1315
    %2015 = vmatpush.bf16.msra.mxu0 %v1311
    %2016 = vmatpush.bf16.msra.mxu0 %v1307
    %2017 = vmatpush.bf16.msra.mxu0 %v1303
    %2018 = vmatpush.bf16.msra.mxu0 %v1299
    %2019 = vmatpush.bf16.msra.mxu0 %v1295
    %2020 = vmatpush.bf16.msra.mxu0 %v1291
    %2021 = vmatpush.bf16.msra.mxu0 %v1287
    %2022 = vmatmul.bf16.gmra.mxu0 %v172
    %v2023 = vpop.f32.mrf.mxu0
    %v2024 = vadd.f32 %v2011, %v2023
    %v2025 = vpop.f32.mrf.mxu0
    %2026 = vdwg.mxu0
    %2027 = vmatpush.bf16.msra.mxu0 %v1347
    %2028 = vmatpush.bf16.msra.mxu0 %v1343
    %2029 = vmatpush.bf16.msra.mxu0 %v1339
    %2030 = vmatpush.bf16.msra.mxu0 %v1335
    %2031 = vmatpush.bf16.msra.mxu0 %v1331
    %2032 = vmatpush.bf16.msra.mxu0 %v1327
    %2033 = vmatpush.bf16.msra.mxu0 %v1323
    %2034 = vmatpush.bf16.msra.mxu0 %v1319
    %2035 = vmatmul.bf16.gmra.mxu0 %v173
    %v2036 = vpop.f32.mrf.mxu0
    %v2037 = vadd.f32 %v2024, %v2036
    %v2038 = vpop.f32.mrf.mxu0
    %2039 = vdwg.mxu0
    %2040 = vmatpush.bf16.msra.mxu0 %v1379
    %2041 = vmatpush.bf16.msra.mxu0 %v1375
    %2042 = vmatpush.bf16.msra.mxu0 %v1371
    %2043 = vmatpush.bf16.msra.mxu0 %v1367
    %2044 = vmatpush.bf16.msra.mxu0 %v1363
    %2045 = vmatpush.bf16.msra.mxu0 %v1359
    %2046 = vmatpush.bf16.msra.mxu0 %v1355
    %2047 = vmatpush.bf16.msra.mxu0 %v1351
    %2048 = vmatmul.bf16.gmra.mxu0 %v174
    %v2049 = vpop.f32.mrf.mxu0
    %v2050 = vadd.f32 %v2037, %v2049
    %v2051 = vpop.f32.mrf.mxu0
    %2052 = vdwg.mxu0
    %2053 = vmatpush.bf16.msra.mxu0 %v1411
    %2054 = vmatpush.bf16.msra.mxu0 %v1407
    %2055 = vmatpush.bf16.msra.mxu0 %v1403
    %2056 = vmatpush.bf16.msra.mxu0 %v1399
    %2057 = vmatpush.bf16.msra.mxu0 %v1395
    %2058 = vmatpush.bf16.msra.mxu0 %v1391
    %2059 = vmatpush.bf16.msra.mxu0 %v1387
    %2060 = vmatpush.bf16.msra.mxu0 %v1383
    %2061 = vmatmul.bf16.gmra.mxu0 %v175
    %v2062 = vpop.f32.mrf.mxu0
    %v2063 = vadd.f32 %v2050, %v2062
    %v2064 = vpop.f32.mrf.mxu0
    %2065 = vdwg.mxu0
    %2066 = vmatpush.bf16.msra.mxu0 %v1443
    %2067 = vmatpush.bf16.msra.mxu0 %v1439
    %2068 = vmatpush.bf16.msra.mxu0 %v1435
    %2069 = vmatpush.bf16.msra.mxu0 %v1431
    %2070 = vmatpush.bf16.msra.mxu0 %v1427
    %2071 = vmatpush.bf16.msra.mxu0 %v1423
    %2072 = vmatpush.bf16.msra.mxu0 %v1419
    %2073 = vmatpush.bf16.msra.mxu0 %v1415
    %2074 = vmatmul.bf16.gmra.mxu0 %v176
    %v2075 = vpop.f32.mrf.mxu0
    %v2076 = vadd.f32 %v2063, %v2075
    %v2077 = vpop.f32.mrf.mxu0
    %2078 = vdwg.mxu0
    %2079 = vmatpush.bf16.msra.mxu0 %v1475
    %2080 = vmatpush.bf16.msra.mxu0 %v1471
    %2081 = vmatpush.bf16.msra.mxu0 %v1467
    %2082 = vmatpush.bf16.msra.mxu0 %v1463
    %2083 = vmatpush.bf16.msra.mxu0 %v1459
    %2084 = vmatpush.bf16.msra.mxu0 %v1455
    %2085 = vmatpush.bf16.msra.mxu0 %v1451
    %2086 = vmatpush.bf16.msra.mxu0 %v1447
    %2087 = vmatmul.bf16.gmra.mxu0 %v177
    %v2088 = vpop.f32.mrf.mxu0
    %v2089 = vadd.f32 %v2076, %v2088
    %v2090 = vpop.f32.mrf.mxu0
    %2091 = vdwg.mxu0
    %2092 = vmatpush.bf16.msra.mxu0 0
    %2093 = vmatpush.bf16.msra.mxu0 0
    %2094 = vmatpush.bf16.msra.mxu0 0
    %2095 = vmatpush.bf16.msra.mxu0 0
    %2096 = vmatpush.bf16.msra.mxu0 0
    %2097 = vmatpush.bf16.msra.mxu0 0
    %2098 = vmatpush.bf16.msra.mxu0 0
    %2099 = vmatpush.bf16.msra.mxu0 %v1749
    %2100 = vmatmul.bf16.gmra.mxu0 %v1739
    %v2101 = vpop.f32.mrf.mxu0
    %v2102 = vadd.f32 %v2089, %v2101
    %v2103 = vpop.f32.mrf.mxu0
    %2104 = vdwg.mxu0
    %2105 = vmatpush.bf16.msra.mxu0 %v1252
    %2106 = vmatpush.bf16.msra.mxu0 %v1248
    %2107 = vmatpush.bf16.msra.mxu0 %v1244
    %2108 = vmatpush.bf16.msra.mxu0 %v1240
    %2109 = vmatpush.bf16.msra.mxu0 %v1236
    %2110 = vmatpush.bf16.msra.mxu0 %v1232
    %2111 = vmatpush.bf16.msra.mxu0 %v1228
    %2112 = vmatpush.bf16.msra.mxu0 %v1224
    %2113 = vmatmul.bf16.gmra.mxu0 %v170
    %v2114 = vpop.f32.mrf.mxu0
    %v2115 = vadd.f32 %v442, %v2114
    %v2116 = vpop.f32.mrf.mxu0
    %2117 = vdwg.mxu0
    %2118 = vmatpush.bf16.msra.mxu0 %v1284
    %2119 = vmatpush.bf16.msra.mxu0 %v1280
    %2120 = vmatpush.bf16.msra.mxu0 %v1276
    %2121 = vmatpush.bf16.msra.mxu0 %v1272
    %2122 = vmatpush.bf16.msra.mxu0 %v1268
    %2123 = vmatpush.bf16.msra.mxu0 %v1264
    %2124 = vmatpush.bf16.msra.mxu0 %v1260
    %2125 = vmatpush.bf16.msra.mxu0 %v1256
    %2126 = vmatmul.bf16.gmra.mxu0 %v171
    %v2127 = vpop.f32.mrf.mxu0
    %v2128 = vadd.f32 %v2115, %v2127
    %v2129 = vpop.f32.mrf.mxu0
    %2130 = vdwg.mxu0
    %2131 = vmatpush.bf16.msra.mxu0 %v1316
    %2132 = vmatpush.bf16.msra.mxu0 %v1312
    %2133 = vmatpush.bf16.msra.mxu0 %v1308
    %2134 = vmatpush.bf16.msra.mxu0 %v1304
    %2135 = vmatpush.bf16.msra.mxu0 %v1300
    %2136 = vmatpush.bf16.msra.mxu0 %v1296
    %2137 = vmatpush.bf16.msra.mxu0 %v1292
    %2138 = vmatpush.bf16.msra.mxu0 %v1288
    %2139 = vmatmul.bf16.gmra.mxu0 %v172
    %v2140 = vpop.f32.mrf.mxu0
    %v2141 = vadd.f32 %v2128, %v2140
    %v2142 = vpop.f32.mrf.mxu0
    %2143 = vdwg.mxu0
    %2144 = vmatpush.bf16.msra.mxu0 %v1348
    %2145 = vmatpush.bf16.msra.mxu0 %v1344
    %2146 = vmatpush.bf16.msra.mxu0 %v1340
    %2147 = vmatpush.bf16.msra.mxu0 %v1336
    %2148 = vmatpush.bf16.msra.mxu0 %v1332
    %2149 = vmatpush.bf16.msra.mxu0 %v1328
    %2150 = vmatpush.bf16.msra.mxu0 %v1324
    %2151 = vmatpush.bf16.msra.mxu0 %v1320
    %2152 = vmatmul.bf16.gmra.mxu0 %v173
    %v2153 = vpop.f32.mrf.mxu0
    %v2154 = vadd.f32 %v2141, %v2153
    %v2155 = vpop.f32.mrf.mxu0
    %2156 = vdwg.mxu0
    %2157 = vmatpush.bf16.msra.mxu0 %v1380
    %2158 = vmatpush.bf16.msra.mxu0 %v1376
    %2159 = vmatpush.bf16.msra.mxu0 %v1372
    %2160 = vmatpush.bf16.msra.mxu0 %v1368
    %2161 = vmatpush.bf16.msra.mxu0 %v1364
    %2162 = vmatpush.bf16.msra.mxu0 %v1360
    %2163 = vmatpush.bf16.msra.mxu0 %v1356
    %2164 = vmatpush.bf16.msra.mxu0 %v1352
    %2165 = vmatmul.bf16.gmra.mxu0 %v174
    %v2166 = vpop.f32.mrf.mxu0
    %v2167 = vadd.f32 %v2154, %v2166
    %v2168 = vpop.f32.mrf.mxu0
    %2169 = vdwg.mxu0
    %2170 = vmatpush.bf16.msra.mxu0 %v1412
    %2171 = vmatpush.bf16.msra.mxu0 %v1408
    %2172 = vmatpush.bf16.msra.mxu0 %v1404
    %2173 = vmatpush.bf16.msra.mxu0 %v1400
    %2174 = vmatpush.bf16.msra.mxu0 %v1396
    %2175 = vmatpush.bf16.msra.mxu0 %v1392
    %2176 = vmatpush.bf16.msra.mxu0 %v1388
    %2177 = vmatpush.bf16.msra.mxu0 %v1384
    %2178 = vmatmul.bf16.gmra.mxu0 %v175
    %v2179 = vpop.f32.mrf.mxu0
    %v2180 = vadd.f32 %v2167, %v2179
    %v2181 = vpop.f32.mrf.mxu0
    %2182 = vdwg.mxu0
    %2183 = vmatpush.bf16.msra.mxu0 %v1444
    %2184 = vmatpush.bf16.msra.mxu0 %v1440
    %2185 = vmatpush.bf16.msra.mxu0 %v1436
    %2186 = vmatpush.bf16.msra.mxu0 %v1432
    %2187 = vmatpush.bf16.msra.mxu0 %v1428
    %2188 = vmatpush.bf16.msra.mxu0 %v1424
    %2189 = vmatpush.bf16.msra.mxu0 %v1420
    %2190 = vmatpush.bf16.msra.mxu0 %v1416
    %2191 = vmatmul.bf16.gmra.mxu0 %v176
    %v2192 = vpop.f32.mrf.mxu0
    %v2193 = vadd.f32 %v2180, %v2192
    %v2194 = vpop.f32.mrf.mxu0
    %2195 = vdwg.mxu0
    %2196 = vmatpush.bf16.msra.mxu0 %v1476
    %2197 = vmatpush.bf16.msra.mxu0 %v1472
    %2198 = vmatpush.bf16.msra.mxu0 %v1468
    %2199 = vmatpush.bf16.msra.mxu0 %v1464
    %2200 = vmatpush.bf16.msra.mxu0 %v1460
    %2201 = vmatpush.bf16.msra.mxu0 %v1456
    %2202 = vmatpush.bf16.msra.mxu0 %v1452
    %2203 = vmatpush.bf16.msra.mxu0 %v1448
    %2204 = vmatmul.bf16.gmra.mxu0 %v177
    %v2205 = vpop.f32.mrf.mxu0
    %v2206 = vadd.f32 %v2193, %v2205
    %v2207 = vpop.f32.mrf.mxu0
    %2208 = vdwg.mxu0
    %2209 = vmatpush.bf16.msra.mxu0 0
    %2210 = vmatpush.bf16.msra.mxu0 0
    %2211 = vmatpush.bf16.msra.mxu0 0
    %2212 = vmatpush.bf16.msra.mxu0 0
    %2213 = vmatpush.bf16.msra.mxu0 0
    %2214 = vmatpush.bf16.msra.mxu0 0
    %2215 = vmatpush.bf16.msra.mxu0 0
    %2216 = vmatpush.bf16.msra.mxu0 %v1752
    %2217 = vmatmul.bf16.gmra.mxu0 %v1739
    %v2218 = vpop.f32.mrf.mxu0
    %v2219 = vadd.f32 %v2206, %v2218
    %v2220 = vpop.f32.mrf.mxu0
    %2221 = vdwg.mxu0
    %vm2222 = vcmp.gt.f32.partialorder %v1868, 0.0
    %vm2223 = vcmp.gt.f32.partialorder %v1985, 0.0
    %vm2224 = vcmp.gt.f32.partialorder %v2102, 0.0
    %vm2225 = vcmp.gt.f32.partialorder %v2219, 0.0
    %v2226 = vmul.f32 %v1868, 0.01
    %v2227 = vmul.f32 %v1985, 0.01
    %v2228 = vmul.f32 %v2102, 0.01
    %v2229 = vmul.f32 %v2219, 0.01
    %v2230 = vsel %vm2222, %v1868, %v2226
    %v2231 = vsel %vm2223, %v1985, %v2227
    %v2232 = vsel %vm2224, %v2102, %v2228
    %v2233 = vsel %vm2225, %v2219, %v2229
    %v2234 = vpack.c.bf16 %v2230, %v2230
    %v2235 = vpack.c.bf16 %v2231, %v2231
    %v2236 = vpack.c.bf16 %v2232, %v2232
    %v2237 = vpack.c.bf16 %v2233, %v2233
    %v2238 = vld [vmem:[#allocation8] sm:$0xff]
    %v2239 = vld [vmem:[#allocation8 + $0x8] sm:$0xff]
    %v2240 = vld [vmem:[#allocation8 + $0x10] sm:$0xff]
    %v2241 = vld [vmem:[#allocation8 + $0x18] sm:$0xff]
    %v2242 = vld [vmem:[#allocation8 + $0x20] sm:$0xff]
    %v2243 = vld [vmem:[#allocation8 + $0x28] sm:$0xff]
    %v2244 = vld [vmem:[#allocation8 + $0x30] sm:$0xff]
    %v2245 = vld [vmem:[#allocation8 + $0x38] sm:$0xff]
    %v2246 = vld [vmem:[#allocation8 + $0x40] sm:$0xff]
    %v2247 = vld [vmem:[#allocation8 + $0x48] sm:$0xff]
    %v2248 = vld [vmem:[#allocation8 + $0x50] sm:$0xff]
    %v2249 = vld [vmem:[#allocation8 + $0x58] sm:$0xff]
    %v2250 = vld [vmem:[#allocation8 + $0x60] sm:$0xff]
    %v2251 = vld [vmem:[#allocation8 + $0x68] sm:$0xff]
    %v2252 = vld [vmem:[#allocation8 + $0x70] sm:$0xff]
    %v2253 = vld [vmem:[#allocation8 + $0x78] sm:$0xff]
    %v2254 = vld [vmem:[#allocation8 + $0x80] sm:$0xff]
    %v2255 = vld [vmem:[#allocation8 + $0x88] sm:$0xff]
    %v2256 = vld [vmem:[#allocation8 + $0x90] sm:$0xff]
    %v2257 = vld [vmem:[#allocation8 + $0x98] sm:$0xff]
    %v2258 = vld [vmem:[#allocation8 + $0xa0] sm:$0xff]
    %v2259 = vld [vmem:[#allocation8 + $0xa8] sm:$0xff]
    %v2260 = vld [vmem:[#allocation8 + $0xb0] sm:$0xff]
    %v2261 = vld [vmem:[#allocation8 + $0xb8] sm:$0xff]
    %v2262 = vld [vmem:[#allocation8 + $0xc0] sm:$0xff]
    %v2263 = vld [vmem:[#allocation8 + $0xc8] sm:$0xff]
    %v2264 = vld [vmem:[#allocation8 + $0xd0] sm:$0xff]
    %v2265 = vld [vmem:[#allocation8 + $0xd8] sm:$0xff]
    %v2266 = vld [vmem:[#allocation8 + $0xe0] sm:$0xff]
    %v2267 = vld [vmem:[#allocation8 + $0xe8] sm:$0xff]
    %v2268 = vld [vmem:[#allocation8 + $0xf0] sm:$0xff]
    %v2269 = vld [vmem:[#allocation8 + $0xf8] sm:$0xff]
    %v2270 = vld [vmem:[#allocation8 + $0x100] sm:$0xff]
    %v2271 = vld [vmem:[#allocation8 + $0x108] sm:$0xff]
    %v2272 = vld [vmem:[#allocation8 + $0x110] sm:$0xff]
    %v2273 = vld [vmem:[#allocation8 + $0x118] sm:$0xff]
    %v2274 = vld [vmem:[#allocation8 + $0x120] sm:$0xff]
    %v2275 = vld [vmem:[#allocation8 + $0x128] sm:$0xff]
    %v2276 = vld [vmem:[#allocation8 + $0x130] sm:$0xff]
    %v2277 = vld [vmem:[#allocation8 + $0x138] sm:$0xff]
    %v2278 = vld [vmem:[#allocation8 + $0x140] sm:$0xff]
    %v2279 = vld [vmem:[#allocation8 + $0x148] sm:$0xff]
    %v2280 = vld [vmem:[#allocation8 + $0x150] sm:$0xff]
    %v2281 = vld [vmem:[#allocation8 + $0x158] sm:$0xff]
    %v2282 = vld [vmem:[#allocation8 + $0x160] sm:$0xff]
    %v2283 = vld [vmem:[#allocation8 + $0x168] sm:$0xff]
    %v2284 = vld [vmem:[#allocation8 + $0x170] sm:$0xff]
    %v2285 = vld [vmem:[#allocation8 + $0x178] sm:$0xff]
    %v2286 = vld [vmem:[#allocation8 + $0x180] sm:$0xff]
    %v2287 = vld [vmem:[#allocation8 + $0x188] sm:$0xff]
    %v2288 = vld [vmem:[#allocation8 + $0x190] sm:$0xff]
    %v2289 = vld [vmem:[#allocation8 + $0x198] sm:$0xff]
    %v2290 = vld [vmem:[#allocation8 + $0x1a0] sm:$0xff]
    %v2291 = vld [vmem:[#allocation8 + $0x1a8] sm:$0xff]
    %v2292 = vld [vmem:[#allocation8 + $0x1b0] sm:$0xff]
    %v2293 = vld [vmem:[#allocation8 + $0x1b8] sm:$0xff]
    %v2294 = vld [vmem:[#allocation8 + $0x1c0] sm:$0xff]
    %v2295 = vld [vmem:[#allocation8 + $0x1c8] sm:$0xff]
    %v2296 = vld [vmem:[#allocation8 + $0x1d0] sm:$0xff]
    %v2297 = vld [vmem:[#allocation8 + $0x1d8] sm:$0xff]
    %v2298 = vld [vmem:[#allocation8 + $0x1e0] sm:$0xff]
    %v2299 = vld [vmem:[#allocation8 + $0x1e8] sm:$0xff]
    %v2300 = vld [vmem:[#allocation8 + $0x1f0] sm:$0xff]
    %v2301 = vld [vmem:[#allocation8 + $0x1f8] sm:$0xff]
    %v2302 = vld [vmem:[#allocation10] sm:$0x3]
    %v2304 = vperm.slane %v2302, 0
    %v2305 = vperm.slane %v2302, 1
    %v2372 = vunpack.c.l.b16 %v2238
    %v2373 = vunpack.c.h.b16 %v2238
    %v2374 = vunpack.c.l.b16 %v2239
    %v2375 = vunpack.c.h.b16 %v2239
    %v2376 = vunpack.c.l.b16 %v2240
    %v2377 = vunpack.c.h.b16 %v2240
    %v2378 = vunpack.c.l.b16 %v2241
    %v2379 = vunpack.c.h.b16 %v2241
    %v2380 = vunpack.c.l.b16 %v2242
    %v2381 = vunpack.c.h.b16 %v2242
    %v2382 = vunpack.c.l.b16 %v2243
    %v2383 = vunpack.c.h.b16 %v2243
    %v2384 = vunpack.c.l.b16 %v2244
    %v2385 = vunpack.c.h.b16 %v2244
    %v2386 = vunpack.c.l.b16 %v2245
    %v2387 = vunpack.c.h.b16 %v2245
    %v2388 = vunpack.c.l.b16 %v2246
    %v2389 = vunpack.c.h.b16 %v2246
    %v2390 = vunpack.c.l.b16 %v2247
    %v2391 = vunpack.c.h.b16 %v2247
    %v2392 = vunpack.c.l.b16 %v2248
    %v2393 = vunpack.c.h.b16 %v2248
    %v2394 = vunpack.c.l.b16 %v2249
    %v2395 = vunpack.c.h.b16 %v2249
    %v2396 = vunpack.c.l.b16 %v2250
    %v2397 = vunpack.c.h.b16 %v2250
    %v2398 = vunpack.c.l.b16 %v2251
    %v2399 = vunpack.c.h.b16 %v2251
    %v2400 = vunpack.c.l.b16 %v2252
    %v2401 = vunpack.c.h.b16 %v2252
    %v2402 = vunpack.c.l.b16 %v2253
    %v2403 = vunpack.c.h.b16 %v2253
    %v2404 = vunpack.c.l.b16 %v2254
    %v2405 = vunpack.c.h.b16 %v2254
    %v2406 = vunpack.c.l.b16 %v2255
    %v2407 = vunpack.c.h.b16 %v2255
    %v2408 = vunpack.c.l.b16 %v2256
    %v2409 = vunpack.c.h.b16 %v2256
    %v2410 = vunpack.c.l.b16 %v2257
    %v2411 = vunpack.c.h.b16 %v2257
    %v2412 = vunpack.c.l.b16 %v2258
    %v2413 = vunpack.c.h.b16 %v2258
    %v2414 = vunpack.c.l.b16 %v2259
    %v2415 = vunpack.c.h.b16 %v2259
    %v2416 = vunpack.c.l.b16 %v2260
    %v2417 = vunpack.c.h.b16 %v2260
    %v2418 = vunpack.c.l.b16 %v2261
    %v2419 = vunpack.c.h.b16 %v2261
    %v2420 = vunpack.c.l.b16 %v2262
    %v2421 = vunpack.c.h.b16 %v2262
    %v2422 = vunpack.c.l.b16 %v2263
    %v2423 = vunpack.c.h.b16 %v2263
    %v2424 = vunpack.c.l.b16 %v2264
    %v2425 = vunpack.c.h.b16 %v2264
    %v2426 = vunpack.c.l.b16 %v2265
    %v2427 = vunpack.c.h.b16 %v2265
    %v2428 = vunpack.c.l.b16 %v2266
    %v2429 = vunpack.c.h.b16 %v2266
    %v2430 = vunpack.c.l.b16 %v2267
    %v2431 = vunpack.c.h.b16 %v2267
    %v2432 = vunpack.c.l.b16 %v2268
    %v2433 = vunpack.c.h.b16 %v2268
    %v2434 = vunpack.c.l.b16 %v2269
    %v2435 = vunpack.c.h.b16 %v2269
    %v2436 = vunpack.c.l.b16 %v2270
    %v2437 = vunpack.c.h.b16 %v2270
    %v2438 = vunpack.c.l.b16 %v2271
    %v2439 = vunpack.c.h.b16 %v2271
    %v2440 = vunpack.c.l.b16 %v2272
    %v2441 = vunpack.c.h.b16 %v2272
    %v2442 = vunpack.c.l.b16 %v2273
    %v2443 = vunpack.c.h.b16 %v2273
    %v2444 = vunpack.c.l.b16 %v2274
    %v2445 = vunpack.c.h.b16 %v2274
    %v2446 = vunpack.c.l.b16 %v2275
    %v2447 = vunpack.c.h.b16 %v2275
    %v2448 = vunpack.c.l.b16 %v2276
    %v2449 = vunpack.c.h.b16 %v2276
    %v2450 = vunpack.c.l.b16 %v2277
    %v2451 = vunpack.c.h.b16 %v2277
    %v2452 = vunpack.c.l.b16 %v2278
    %v2453 = vunpack.c.h.b16 %v2278
    %v2454 = vunpack.c.l.b16 %v2279
    %v2455 = vunpack.c.h.b16 %v2279
    %v2456 = vunpack.c.l.b16 %v2280
    %v2457 = vunpack.c.h.b16 %v2280
    %v2458 = vunpack.c.l.b16 %v2281
    %v2459 = vunpack.c.h.b16 %v2281
    %v2460 = vunpack.c.l.b16 %v2282
    %v2461 = vunpack.c.h.b16 %v2282
    %v2462 = vunpack.c.l.b16 %v2283
    %v2463 = vunpack.c.h.b16 %v2283
    %v2464 = vunpack.c.l.b16 %v2284
    %v2465 = vunpack.c.h.b16 %v2284
    %v2466 = vunpack.c.l.b16 %v2285
    %v2467 = vunpack.c.h.b16 %v2285
    %v2468 = vunpack.c.l.b16 %v2286
    %v2469 = vunpack.c.h.b16 %v2286
    %v2470 = vunpack.c.l.b16 %v2287
    %v2471 = vunpack.c.h.b16 %v2287
    %v2472 = vunpack.c.l.b16 %v2288
    %v2473 = vunpack.c.h.b16 %v2288
    %v2474 = vunpack.c.l.b16 %v2289
    %v2475 = vunpack.c.h.b16 %v2289
    %v2476 = vunpack.c.l.b16 %v2290
    %v2477 = vunpack.c.h.b16 %v2290
    %v2478 = vunpack.c.l.b16 %v2291
    %v2479 = vunpack.c.h.b16 %v2291
    %v2480 = vunpack.c.l.b16 %v2292
    %v2481 = vunpack.c.h.b16 %v2292
    %v2482 = vunpack.c.l.b16 %v2293
    %v2483 = vunpack.c.h.b16 %v2293
    %v2484 = vunpack.c.l.b16 %v2294
    %v2485 = vunpack.c.h.b16 %v2294
    %v2486 = vunpack.c.l.b16 %v2295
    %v2487 = vunpack.c.h.b16 %v2295
    %v2488 = vunpack.c.l.b16 %v2296
    %v2489 = vunpack.c.h.b16 %v2296
    %v2490 = vunpack.c.l.b16 %v2297
    %v2491 = vunpack.c.h.b16 %v2297
    %v2492 = vunpack.c.l.b16 %v2298
    %v2493 = vunpack.c.h.b16 %v2298
    %v2494 = vunpack.c.l.b16 %v2299
    %v2495 = vunpack.c.h.b16 %v2299
    %v2496 = vunpack.c.l.b16 %v2300
    %v2497 = vunpack.c.h.b16 %v2300
    %v2498 = vunpack.c.l.b16 %v2301
    %v2499 = vunpack.c.h.b16 %v2301
    %v2500 = vpack.c.b16 %v2374, %v2372
    %v2501 = vpack.c.b16 %v2375, %v2373
    %v2502 = vpack.c.b16 %v2378, %v2376
    %v2503 = vpack.c.b16 %v2379, %v2377
    %v2504 = vpack.c.b16 %v2382, %v2380
    %v2505 = vpack.c.b16 %v2383, %v2381
    %v2506 = vpack.c.b16 %v2386, %v2384
    %v2507 = vpack.c.b16 %v2387, %v2385
    %v2508 = vpack.c.b16 %v2390, %v2388
    %v2509 = vpack.c.b16 %v2391, %v2389
    %v2510 = vpack.c.b16 %v2394, %v2392
    %v2511 = vpack.c.b16 %v2395, %v2393
    %v2512 = vpack.c.b16 %v2398, %v2396
    %v2513 = vpack.c.b16 %v2399, %v2397
    %v2514 = vpack.c.b16 %v2402, %v2400
    %v2515 = vpack.c.b16 %v2403, %v2401
    %v2516 = vpack.c.b16 %v2406, %v2404
    %v2517 = vpack.c.b16 %v2407, %v2405
    %v2518 = vpack.c.b16 %v2410, %v2408
    %v2519 = vpack.c.b16 %v2411, %v2409
    %v2520 = vpack.c.b16 %v2414, %v2412
    %v2521 = vpack.c.b16 %v2415, %v2413
    %v2522 = vpack.c.b16 %v2418, %v2416
    %v2523 = vpack.c.b16 %v2419, %v2417
    %v2524 = vpack.c.b16 %v2422, %v2420
    %v2525 = vpack.c.b16 %v2423, %v2421
    %v2526 = vpack.c.b16 %v2426, %v2424
    %v2527 = vpack.c.b16 %v2427, %v2425
    %v2528 = vpack.c.b16 %v2430, %v2428
    %v2529 = vpack.c.b16 %v2431, %v2429
    %v2530 = vpack.c.b16 %v2434, %v2432
    %v2531 = vpack.c.b16 %v2435, %v2433
    %v2532 = vpack.c.b16 %v2438, %v2436
    %v2533 = vpack.c.b16 %v2439, %v2437
    %v2534 = vpack.c.b16 %v2442, %v2440
    %v2535 = vpack.c.b16 %v2443, %v2441
    %v2536 = vpack.c.b16 %v2446, %v2444
    %v2537 = vpack.c.b16 %v2447, %v2445
    %v2538 = vpack.c.b16 %v2450, %v2448
    %v2539 = vpack.c.b16 %v2451, %v2449
    %v2540 = vpack.c.b16 %v2454, %v2452
    %v2541 = vpack.c.b16 %v2455, %v2453
    %v2542 = vpack.c.b16 %v2458, %v2456
    %v2543 = vpack.c.b16 %v2459, %v2457
    %v2544 = vpack.c.b16 %v2462, %v2460
    %v2545 = vpack.c.b16 %v2463, %v2461
    %v2546 = vpack.c.b16 %v2466, %v2464
    %v2547 = vpack.c.b16 %v2467, %v2465
    %v2548 = vpack.c.b16 %v2470, %v2468
    %v2549 = vpack.c.b16 %v2471, %v2469
    %v2550 = vpack.c.b16 %v2474, %v2472
    %v2551 = vpack.c.b16 %v2475, %v2473
    %v2552 = vpack.c.b16 %v2478, %v2476
    %v2553 = vpack.c.b16 %v2479, %v2477
    %v2554 = vpack.c.b16 %v2482, %v2480
    %v2555 = vpack.c.b16 %v2483, %v2481
    %v2556 = vpack.c.b16 %v2486, %v2484
    %v2557 = vpack.c.b16 %v2487, %v2485
    %v2558 = vpack.c.b16 %v2490, %v2488
    %v2559 = vpack.c.b16 %v2491, %v2489
    %v2560 = vpack.c.b16 %v2494, %v2492
    %v2561 = vpack.c.b16 %v2495, %v2493
    %v2562 = vpack.c.b16 %v2498, %v2496
    %v2563 = vpack.c.b16 %v2499, %v2497
    %2628 = vmatpush.bf16.msra.mxu0 %v2514
    %2629 = vmatpush.bf16.msra.mxu0 %v2512
    %2630 = vmatpush.bf16.msra.mxu0 %v2510
    %2631 = vmatpush.bf16.msra.mxu0 %v2508
    %2632 = vmatpush.bf16.msra.mxu0 %v2506
    %2633 = vmatpush.bf16.msra.mxu0 %v2504
    %2634 = vmatpush.bf16.msra.mxu0 %v2502
    %2635 = vmatpush.bf16.msra.mxu0 %v2500
    %2636 = vmatmul.bf16.gmra.mxu0 %v2234
    %v2637 = vpop.f32.mrf.mxu0
    %v2638 = vadd.f32 %v2304, %v2637
    %v2639 = vpop.f32.mrf.mxu0
    %2640 = vdwg.mxu0
    %2641 = vmatpush.bf16.msra.mxu0 %v2530
    %2642 = vmatpush.bf16.msra.mxu0 %v2528
    %2643 = vmatpush.bf16.msra.mxu0 %v2526
    %2644 = vmatpush.bf16.msra.mxu0 %v2524
    %2645 = vmatpush.bf16.msra.mxu0 %v2522
    %2646 = vmatpush.bf16.msra.mxu0 %v2520
    %2647 = vmatpush.bf16.msra.mxu0 %v2518
    %2648 = vmatpush.bf16.msra.mxu0 %v2516
    %2649 = vmatmul.bf16.gmra.mxu0 %v2235
    %v2650 = vpop.f32.mrf.mxu0
    %v2651 = vadd.f32 %v2638, %v2650
    %v2652 = vpop.f32.mrf.mxu0
    %2653 = vdwg.mxu0
    %2654 = vmatpush.bf16.msra.mxu0 %v2546
    %2655 = vmatpush.bf16.msra.mxu0 %v2544
    %2656 = vmatpush.bf16.msra.mxu0 %v2542
    %2657 = vmatpush.bf16.msra.mxu0 %v2540
    %2658 = vmatpush.bf16.msra.mxu0 %v2538
    %2659 = vmatpush.bf16.msra.mxu0 %v2536
    %2660 = vmatpush.bf16.msra.mxu0 %v2534
    %2661 = vmatpush.bf16.msra.mxu0 %v2532
    %2662 = vmatmul.bf16.gmra.mxu0 %v2236
    %v2663 = vpop.f32.mrf.mxu0
    %v2664 = vadd.f32 %v2651, %v2663
    %v2665 = vpop.f32.mrf.mxu0
    %2666 = vdwg.mxu0
    %2667 = vmatpush.bf16.msra.mxu0 %v2562
    %2668 = vmatpush.bf16.msra.mxu0 %v2560
    %2669 = vmatpush.bf16.msra.mxu0 %v2558
    %2670 = vmatpush.bf16.msra.mxu0 %v2556
    %2671 = vmatpush.bf16.msra.mxu0 %v2554
    %2672 = vmatpush.bf16.msra.mxu0 %v2552
    %2673 = vmatpush.bf16.msra.mxu0 %v2550
    %2674 = vmatpush.bf16.msra.mxu0 %v2548
    %2675 = vmatmul.bf16.gmra.mxu0 %v2237
    %v2676 = vpop.f32.mrf.mxu0
    %v2677 = vadd.f32 %v2664, %v2676
    %v2678 = vpop.f32.mrf.mxu0
    %2679 = vdwg.mxu0
    %2680 = vmatpush.bf16.msra.mxu0 %v2515
    %2681 = vmatpush.bf16.msra.mxu0 %v2513
    %2682 = vmatpush.bf16.msra.mxu0 %v2511
    %2683 = vmatpush.bf16.msra.mxu0 %v2509
    %2684 = vmatpush.bf16.msra.mxu0 %v2507
    %2685 = vmatpush.bf16.msra.mxu0 %v2505
    %2686 = vmatpush.bf16.msra.mxu0 %v2503
    %2687 = vmatpush.bf16.msra.mxu0 %v2501
    %2688 = vmatmul.bf16.gmra.mxu0 %v2234
    %v2689 = vpop.f32.mrf.mxu0
    %v2690 = vadd.f32 %v2305, %v2689
    %v2691 = vpop.f32.mrf.mxu0
    %2692 = vdwg.mxu0
    %2693 = vmatpush.bf16.msra.mxu0 %v2531
    %2694 = vmatpush.bf16.msra.mxu0 %v2529
    %2695 = vmatpush.bf16.msra.mxu0 %v2527
    %2696 = vmatpush.bf16.msra.mxu0 %v2525
    %2697 = vmatpush.bf16.msra.mxu0 %v2523
    %2698 = vmatpush.bf16.msra.mxu0 %v2521
    %2699 = vmatpush.bf16.msra.mxu0 %v2519
    %2700 = vmatpush.bf16.msra.mxu0 %v2517
    %2701 = vmatmul.bf16.gmra.mxu0 %v2235
    %v2702 = vpop.f32.mrf.mxu0
    %v2703 = vadd.f32 %v2690, %v2702
    %v2704 = vpop.f32.mrf.mxu0
    %2705 = vdwg.mxu0
    %2706 = vmatpush.bf16.msra.mxu0 %v2547
    %2707 = vmatpush.bf16.msra.mxu0 %v2545
    %2708 = vmatpush.bf16.msra.mxu0 %v2543
    %2709 = vmatpush.bf16.msra.mxu0 %v2541
    %2710 = vmatpush.bf16.msra.mxu0 %v2539
    %2711 = vmatpush.bf16.msra.mxu0 %v2537
    %2712 = vmatpush.bf16.msra.mxu0 %v2535
    %2713 = vmatpush.bf16.msra.mxu0 %v2533
    %2714 = vmatmul.bf16.gmra.mxu0 %v2236
    %v2715 = vpop.f32.mrf.mxu0
    %v2716 = vadd.f32 %v2703, %v2715
    %v2717 = vpop.f32.mrf.mxu0
    %2718 = vdwg.mxu0
    %2719 = vmatpush.bf16.msra.mxu0 %v2563
    %2720 = vmatpush.bf16.msra.mxu0 %v2561
    %2721 = vmatpush.bf16.msra.mxu0 %v2559
    %2722 = vmatpush.bf16.msra.mxu0 %v2557
    %2723 = vmatpush.bf16.msra.mxu0 %v2555
    %2724 = vmatpush.bf16.msra.mxu0 %v2553
    %2725 = vmatpush.bf16.msra.mxu0 %v2551
    %2726 = vmatpush.bf16.msra.mxu0 %v2549
    %2727 = vmatmul.bf16.gmra.mxu0 %v2237
    %v2728 = vpop.f32.mrf.mxu0
    %v2729 = vadd.f32 %v2716, %v2728
    %v2730 = vpop.f32.mrf.mxu0
    %2731 = vdwg.mxu0
    %vm2732 = vcmp.gt.f32.partialorder %v2677, 0.0
    %vm2733 = vcmp.gt.f32.partialorder %v2729, 0.0
    %v2734 = vmul.f32 %v2677, 0.01
    %v2735 = vmul.f32 %v2729, 0.01
    %v2736 = vsel %vm2732, %v2677, %v2734
    %v2737 = vsel %vm2733, %v2729, %v2735
    %v2738 = vpack.c.bf16 %v2736, %v2736
    %v2739 = vpack.c.bf16 %v2737, %v2737
    %v2740 = vld [vmem:[%s5] sm:$0xf]
    %v2741 = vld [vmem:[%s5 + $0x4] sm:$0xf]
    %v2742 = vld [vmem:[%s5 + $0x8] sm:$0xf]
    %v2743 = vld [vmem:[%s5 + $0xc] sm:$0xf]
    %v2744 = vld [vmem:[%s5 + $0x10] sm:$0xf]
    %v2745 = vld [vmem:[%s5 + $0x14] sm:$0xf]
    %v2746 = vld [vmem:[%s5 + $0x18] sm:$0xf]
    %v2747 = vld [vmem:[%s5 + $0x1c] sm:$0xf]
    %v2748 = vld [vmem:[%s5 + $0x20] sm:$0xf]
    %v2749 = vld [vmem:[%s5 + $0x24] sm:$0xf]
    %v2750 = vld [vmem:[%s5 + $0x28] sm:$0xf]
    %v2751 = vld [vmem:[%s5 + $0x2c] sm:$0xf]
    %v2752 = vld [vmem:[%s5 + $0x30] sm:$0xf]
    %v2753 = vld [vmem:[%s5 + $0x34] sm:$0xf]
    %v2754 = vld [vmem:[%s5 + $0x38] sm:$0xf]
    %v2755 = vld [vmem:[%s5 + $0x3c] sm:$0xf]
    %v2756 = vld [vmem:[%s5 + $0x40] sm:$0xf]
    %v2757 = vld [vmem:[%s5 + $0x44] sm:$0xf]
    %v2758 = vld [vmem:[%s5 + $0x48] sm:$0xf]
    %v2759 = vld [vmem:[%s5 + $0x4c] sm:$0xf]
    %v2760 = vld [vmem:[%s5 + $0x50] sm:$0xf]
    %v2761 = vld [vmem:[%s5 + $0x54] sm:$0xf]
    %v2762 = vld [vmem:[%s5 + $0x58] sm:$0xf]
    %v2763 = vld [vmem:[%s5 + $0x5c] sm:$0xf]
    %v2764 = vld [vmem:[%s5 + $0x60] sm:$0xf]
    %v2765 = vld [vmem:[%s5 + $0x64] sm:$0xf]
    %v2766 = vld [vmem:[%s5 + $0x68] sm:$0xf]
    %v2767 = vld [vmem:[%s5 + $0x6c] sm:$0xf]
    %v2768 = vld [vmem:[%s5 + $0x70] sm:$0xf]
    %v2769 = vld [vmem:[%s5 + $0x74] sm:$0xf]
    %v2770 = vld [vmem:[%s5 + $0x78] sm:$0xf]
    %v2771 = vld [vmem:[%s5 + $0x7c] sm:$0xf]
    %v2772 = vld [vmem:[#allocation11] sm:$0x1]
    %v2774 = vperm.slane %v2772, 0
    %v2808 = vunpack.c.l.b16 %v2740
    %v2809 = vunpack.c.l.b16 %v2741
    %v2810 = vunpack.c.l.b16 %v2742
    %v2811 = vunpack.c.l.b16 %v2743
    %v2812 = vunpack.c.l.b16 %v2744
    %v2813 = vunpack.c.l.b16 %v2745
    %v2814 = vunpack.c.l.b16 %v2746
    %v2815 = vunpack.c.l.b16 %v2747
    %v2816 = vunpack.c.l.b16 %v2748
    %v2817 = vunpack.c.l.b16 %v2749
    %v2818 = vunpack.c.l.b16 %v2750
    %v2819 = vunpack.c.l.b16 %v2751
    %v2820 = vunpack.c.l.b16 %v2752
    %v2821 = vunpack.c.l.b16 %v2753
    %v2822 = vunpack.c.l.b16 %v2754
    %v2823 = vunpack.c.l.b16 %v2755
    %v2824 = vunpack.c.l.b16 %v2756
    %v2825 = vunpack.c.l.b16 %v2757
    %v2826 = vunpack.c.l.b16 %v2758
    %v2827 = vunpack.c.l.b16 %v2759
    %v2828 = vunpack.c.l.b16 %v2760
    %v2829 = vunpack.c.l.b16 %v2761
    %v2830 = vunpack.c.l.b16 %v2762
    %v2831 = vunpack.c.l.b16 %v2763
    %v2832 = vunpack.c.l.b16 %v2764
    %v2833 = vunpack.c.l.b16 %v2765
    %v2834 = vunpack.c.l.b16 %v2766
    %v2835 = vunpack.c.l.b16 %v2767
    %v2836 = vunpack.c.l.b16 %v2768
    %v2837 = vunpack.c.l.b16 %v2769
    %v2838 = vunpack.c.l.b16 %v2770
    %v2839 = vunpack.c.l.b16 %v2771
    %v2840 = vpack.c.b16 %v2809, %v2808
    %v2841 = vpack.c.b16 %v2811, %v2810
    %v2842 = vpack.c.b16 %v2813, %v2812
    %v2843 = vpack.c.b16 %v2815, %v2814
    %v2844 = vpack.c.b16 %v2817, %v2816
    %v2845 = vpack.c.b16 %v2819, %v2818
    %v2846 = vpack.c.b16 %v2821, %v2820
    %v2847 = vpack.c.b16 %v2823, %v2822
    %v2848 = vpack.c.b16 %v2825, %v2824
    %v2849 = vpack.c.b16 %v2827, %v2826
    %v2850 = vpack.c.b16 %v2829, %v2828
    %v2851 = vpack.c.b16 %v2831, %v2830
    %v2852 = vpack.c.b16 %v2833, %v2832
    %v2853 = vpack.c.b16 %v2835, %v2834
    %v2854 = vpack.c.b16 %v2837, %v2836
    %v2855 = vpack.c.b16 %v2839, %v2838
    %2872 = vmatpush.bf16.msra.mxu0 %v2847
    %2873 = vmatpush.bf16.msra.mxu0 %v2846
    %2874 = vmatpush.bf16.msra.mxu0 %v2845
    %2875 = vmatpush.bf16.msra.mxu0 %v2844
    %2876 = vmatpush.bf16.msra.mxu0 %v2843
    %2877 = vmatpush.bf16.msra.mxu0 %v2842
    %2878 = vmatpush.bf16.msra.mxu0 %v2841
    %2879 = vmatpush.bf16.msra.mxu0 %v2840
    %2880 = vmatmul.bf16.gmra.mxu0 %v2738
    %v2881 = vpop.f32.mrf.mxu0
    %v2882 = vadd.f32 %v2774, %v2881
    %v2883 = vpop.f32.mrf.mxu0
    %2884 = vdwg.mxu0
    %2885 = vmatpush.bf16.msra.mxu0 %v2855
    %2886 = vmatpush.bf16.msra.mxu0 %v2854
    %2887 = vmatpush.bf16.msra.mxu0 %v2853
    %2888 = vmatpush.bf16.msra.mxu0 %v2852
    %2889 = vmatpush.bf16.msra.mxu0 %v2851
    %2890 = vmatpush.bf16.msra.mxu0 %v2850
    %2891 = vmatpush.bf16.msra.mxu0 %v2849
    %2892 = vmatpush.bf16.msra.mxu0 %v2848
    %2893 = vmatmul.bf16.gmra.mxu0 %v2739
    %v2894 = vpop.f32.mrf.mxu0
    %v2895 = vadd.f32 %v2882, %v2894
    %v2896 = vpop.f32.mrf.mxu0
    %2897 = vdwg.mxu0
    %vm2898 = vcmp.gt.f32.partialorder %v2895, 0.0
    %v2899 = vmul.f32 %v2895, 0.01
    %v2900 = vsel %vm2898, %v2895, %v2899
    %v2901 = vld [vmem:[#allocation13] sm:$0x1]
    %v2903 = vperm.slane %v2901, 0
    %v2905 = vmul.f32 %v2900, %v2903
    %vm2906 = vcmask 519168
    %v2907 = vsel %vm2906, %v2905, 0.0
    %2908 = vadd.xlane.f32.xlu0 %v2907
    %v2909 = vpop.xlane.xlu0 %2908
    %v2910 = vld [vmem:[#allocation2] sm:$0x1]
    %v2912 = vperm.slane %v2910, 0
    %v2914 = vadd.f32 %v2909, %v2912
    %v2915 = vsub.f32 0.0, %v2914
    %v2916 = vmul.f32 %v2915, 1.442695
    %v2917 = vpow.pop %v2916
    %v2918 = vadd.f32 %v2917, 1.0
    %v2919 = vrcp.pop %v2918
    %vm2920 = vcmask 3072
    %2921 = vst.msk [vmem:[%s9] sm:$0xf] %vm2920, %v2919
    // Predicated region
    $region66: #{tpu_custom_call.1} parent=1 // pred_check
      _
    $region67: #{tpu_custom_call.1} parent=1 // pred_check_branch
      %2923 = sbr.rel (0) target = $region69
    $region68: #{tpu_custom_call.1} parent=1 // pred_region
      _
    $region69: #{tpu_custom_call.1} parent=1 // pred_fallthru
      _
    // Predicated region
    $region70: #{tpu_custom_call.1} parent=1 // pred_check
      _
    $region71: #{tpu_custom_call.1} parent=1 // pred_check_branch
      %2925 = sbr.rel (0) target = $region73
    $region72: #{tpu_custom_call.1} parent=1 // pred_region
      _
    $region73: #{tpu_custom_call.1} parent=1 // pred_fallthru
      _
    %2926 = vsyncpa [#allocation4], 1
    %2927 = vsyncpa [#allocation6], 1
    %2928 = vsyncpa [#allocation9], 1
    %2929 = vsyncpa [#allocation12], 1

</llo_original>
